<compile_context>
chip_gen: v5e
topology: v5e:2x2
jax: 0.10.0
libtpu: 0.0.40
codegen_flags: <defaults>
</compile_context>

<pallas_src>
import functools

import jax
import jax.numpy as jnp
from jax import lax
from jax.experimental import pallas as pl
from jax.experimental.pallas import tpu as pltpu

LEAKY_SLOPE = 0.01   # nn.LeakyReLU default
BN_EPS = 1e-5        # nn.BatchNorm2d default


# ---------------------------------------------------------------------------
# Host helper: per-object bilinear interpolation matrices reproducing
# tensor_linspace + F.grid_sample(bilinear, zeros padding, align_corners=False)
# ---------------------------------------------------------------------------
def _interp_matrix(c0, c1, out_size, in_size):
    t = jnp.linspace(0.0, 1.0, out_size).astype(jnp.float32)              # (out,)
    g0 = 2.0 * c0 - 1.0                                                   # bbox -> [-1, 1]
    g1 = 2.0 * c1 - 1.0
    g = (1.0 - t)[None, :] * g0[:, None] + t[None, :] * g1[:, None]       # (B, out)
    pix = ((g + 1.0) * in_size - 1.0) / 2.0                               # unnormalize
    lo = jnp.floor(pix)
    w_hi = pix - lo
    w_lo = 1.0 - w_hi
    lo_i = lo.astype(jnp.int32)
    hi_i = lo_i + 1
    idx = jnp.arange(in_size, dtype=jnp.int32)
    m_lo = (idx[None, None, :] == lo_i[:, :, None]).astype(jnp.float32)   # OOB -> 0
    m_hi = (idx[None, None, :] == hi_i[:, :, None]).astype(jnp.float32)
    return w_lo[:, :, None] * m_lo + w_hi[:, :, None] * m_hi              # (B, out, in)


# ---------------------------------------------------------------------------
# The single fused kernel
# ---------------------------------------------------------------------------
def _fused_kernel(o2i_ref,                                    # scalar prefetch (SMEM)
                  objs_ref, imgs_ref, wyblk_ref, wxt_ref,     # labels + crop inputs
                  w1f_ref, b1_ref, rsel_ref, rselt_ref,       # conv1 (im2col-folded) + BN selectors
                  w2_ref, b2_ref, wfc_ref, bfc_ref,           # conv2 + FC
                  wh_ref, bh_ref,                             # fused real/obj heads
                  real_ref, loss_ref,                         # outputs
                  crop3_scr, cropf_scr):                      # VMEM scratch
    B, R, WW = crop3_scr.shape           # R = C*HH
    SC1 = w1f_ref.shape[1]
    C1 = rsel_ref.shape[1]
    S = SC1 // C1
    NUM = bh_ref.shape[1] - 1
    f32 = jnp.float32

    # ---- 1. bbox crop (grid_sample) as separable interpolation matmuls ------
    # imgs_ref is (N, C*H, W); gather the source image with a dynamic leading-
    # axis index read from SMEM (scalar prefetch) -- no host gather.
    for b in range(B):
        img = imgs_ref[o2i_ref[b]]                                       # (C*H, W)
        tx = jnp.dot(img, wxt_ref[b], preferred_element_type=f32)        # (C*H, WW)
        crop3_scr[b] = jnp.dot(wyblk_ref[b], tx,
                               preferred_element_type=f32)               # (C*HH, WW)

    # ---- 2. flatten crops to lane-dense (B, C*HH*WW) rows -------------------
    cropv = crop3_scr[...]
    for r in range(R):
        cropf_scr[:, r * WW:(r + 1) * WW] = cropv[:, r, :]

    # ---- 3. conv1 as ONE matmul (im2col folded into w1full on the host) -----
    h1 = jnp.dot(cropf_scr[...], w1f_ref[...],
                 preferred_element_type=f32) + b1_ref[...]               # (B, S*C1)

    # ---- 4. BatchNorm (training batch stats) + LeakyReLU --------------------
    cnt = float(B * S)
    mean_c = jnp.dot(jnp.sum(h1, axis=0, keepdims=True), rsel_ref[...],
                     preferred_element_type=f32) / cnt                   # (1, C1)
    mean_l = jnp.dot(mean_c, rselt_ref[...], preferred_element_type=f32) # (1, S*C1)
    d = h1 - mean_l
    var_c = jnp.dot(jnp.sum(d * d, axis=0, keepdims=True), rsel_ref[...],
                    preferred_element_type=f32) / cnt                    # biased var
    inv_c = lax.rsqrt(var_c + BN_EPS)
    inv_l = jnp.dot(inv_c, rselt_ref[...], preferred_element_type=f32)   # (1, S*C1)
    xn = d * inv_l
    xa = jnp.where(xn >= 0, xn, LEAKY_SLOPE * xn)                        # (B, S*C1)

    # ---- 5. conv2 (one matmul), GAP (1x1 -> identity), FC, fused heads ------
    h2 = jnp.dot(xa, w2_ref[...], preferred_element_type=f32) + b2_ref[...]      # (B, C2)
    vecs = jnp.dot(h2, wfc_ref[...], preferred_element_type=f32) + bfc_ref[...]  # (B, 1024)
    scores = jnp.dot(vecs, wh_ref[...], preferred_element_type=f32) + bh_ref[...]
    real_ref[...] = scores[:, 0:1]                                        # (B, 1)
    obj = scores[:, 1:1 + NUM]                                            # (B, NUM)

    # ---- 6. F.cross_entropy (mean) with lane-iota one-hot --------------------
    m = jnp.max(obj, axis=1, keepdims=True)
    lse = m + jnp.log(jnp.sum(jnp.exp(obj - m), axis=1, keepdims=True))
    lane = lax.broadcasted_iota(jnp.int32, (B, NUM), 1)
    onehot = jnp.where(lane == objs_ref[...], 1.0, 0.0).astype(f32)
    picked = jnp.sum(obj * onehot, axis=1, keepdims=True)                 # (B, 1)
    loss = jnp.mean(lse - picked)
    loss_ref[...] = loss * jnp.ones((1, 1), f32)


# ---------------------------------------------------------------------------
# Parameter setup (deterministic synthetic, kaiming-like scaling)
# ---------------------------------------------------------------------------
def init_params(key, num_objects, cin=3, c1=8, c2=16, hidden=1024):
    ks = jax.random.split(key, 10)
    f32 = jnp.float32
    return dict(
        w1=jax.random.normal(ks[0], (c1, cin, 3, 3), f32) * jnp.sqrt(2.0 / (cin * 9)),
        b1=jax.random.normal(ks[1], (c1,), f32) * 0.01,
        w2=jax.random.normal(ks[2], (c2, c1, 3, 3), f32) * jnp.sqrt(2.0 / (c1 * 9)),
        b2=jax.random.normal(ks[3], (c2,), f32) * 0.01,
        wfc=jax.random.normal(ks[4], (c2, hidden), f32) * (1.0 / jnp.sqrt(c2)),
        bfc=jax.random.normal(ks[5], (hidden,), f32) * 0.01,
        wr=jax.random.normal(ks[6], (hidden, 1), f32) * (1.0 / jnp.sqrt(hidden)),
        br=jax.random.normal(ks[7], (1,), f32) * 0.01,
        wo=jax.random.normal(ks[8], (hidden, num_objects), f32) * (1.0 / jnp.sqrt(hidden)),
        bo=jax.random.normal(ks[9], (num_objects,), f32) * 0.01,
    )


# ---------------------------------------------------------------------------
# Full ObjCropDiscriminator forward (single fused pallas_call)
# ---------------------------------------------------------------------------
@functools.partial(jax.jit, static_argnames=("object_size",))
def obj_crop_discriminator_forward(params, imgs, objs, boxes, obj_to_img, object_size=8):
    N, C, H, W = imgs.shape
    B = boxes.shape[0]
    HH = WW = object_size
    K, stride = 3, 2
    OH = (HH - K) // stride + 1
    OW = (WW - K) // stride + 1
    S = OH * OW
    f32 = jnp.float32

    w1 = params["w1"].astype(f32)
    C1 = w1.shape[0]
    w2 = params["w2"].astype(f32)
    C2 = w2.shape[0]
    hidden = params["wfc"].shape[1]
    num_obj = params["wo"].shape[1]

    imgs3 = imgs.astype(f32).reshape(N, C * H, W)

    # -- per-object separable bilinear interp matrices (box-dependent, tiny) ---
    x0, y0, x1, y1 = boxes[:, 0], boxes[:, 1], boxes[:, 2], boxes[:, 3]
    wy = _interp_matrix(y0, y1, HH, H)                                # (B, HH, H)
    wxt = jnp.transpose(_interp_matrix(x0, x1, WW, W), (0, 2, 1))     # (B, W, WW)
    eye_c = jnp.eye(C, dtype=f32)
    wyblk = jnp.einsum('cd,bih->bcidh', eye_c, wy).reshape(B, C * HH, C * H)

    # -- conv1 weights scattered over the flattened crop (im2col folded in) ----
    oi = jnp.arange(OH); ki = jnp.arange(K); ii = jnp.arange(HH)
    mask_i = (ii[None, None, :] ==
              (oi[:, None, None] * stride + ki[None, :, None])).astype(f32)   # (OH,K,HH)
    oj = jnp.arange(OW); kj = jnp.arange(K); jj = jnp.arange(WW)
    mask_j = (jj[None, None, :] ==
              (oj[:, None, None] * stride + kj[None, :, None])).astype(f32)   # (OW,K,WW)
    w1full = jnp.einsum('qcab,xai,ybj->cijxyq', w1, mask_i, mask_j)
    w1full = w1full.reshape(C * HH * WW, S * C1)                      # (C*HH*WW, S*C1)
    b1tile = jnp.tile(params["b1"].reshape(1, C1).astype(f32), (1, S))

    # -- per-channel reduce / broadcast selectors for BatchNorm stats ----------
    rsel = jnp.tile(jnp.eye(C1, dtype=f32), (S, 1))                   # (S*C1, C1)
    rselt = rsel.T                                                    # (C1, S*C1)

    # -- conv2 (3x3 valid s2 on the 3x3 map -> 1x1) as one matmul --------------
    w2c = jnp.transpose(w2, (2, 3, 1, 0)).reshape(S * C1, C2)
    b2row = params["b2"].reshape(1, C2).astype(f32)
    wfc = params["wfc"].astype(f32)
    bfc = params["bfc"].reshape(1, hidden).astype(f32)
    wh = jnp.concatenate([params["wr"], params["wo"]], axis=1).astype(f32)  # (hidden, 1+NUM)
    bh = jnp.concatenate([params["br"].reshape(1, 1),
                          params["bo"].reshape(1, num_obj)], axis=1).astype(f32)

    objs_col = objs.astype(jnp.int32).reshape(B, 1)

    def fs(shape):
        nd = len(shape)
        return pl.BlockSpec(shape, lambda i, *_, nd=nd: (0,) * nd)

    grid_spec = pltpu.PrefetchScalarGridSpec(
        num_scalar_prefetch=1,                      # obj_to_img -> SMEM
        grid=(1,),
        in_specs=[
            fs((B, 1)),                             # objs labels (int32)
            fs((N, C * H, W)),                      # images
            fs((B, C * HH, C * H)),                 # block-diag Y interp
            fs((B, W, WW)),                         # X interp (transposed)
            fs((C * HH * WW, S * C1)), fs((1, S * C1)),
            fs((S * C1, C1)), fs((C1, S * C1)),
            fs((S * C1, C2)), fs((1, C2)),
            fs((C2, hidden)), fs((1, hidden)),
            fs((hidden, 1 + num_obj)), fs((1, 1 + num_obj)),
        ],
        out_specs=(fs((B, 1)), fs((1, 1))),
        scratch_shapes=[
            pltpu.VMEM((B, C * HH, WW), f32),       # per-object crops
            pltpu.VMEM((B, C * HH * WW), f32),      # lane-dense flattened crops
        ],
    )

    real, loss = pl.pallas_call(
        _fused_kernel,
        out_shape=(jax.ShapeDtypeStruct((B, 1), f32),
                   jax.ShapeDtypeStruct((1, 1), f32)),
        grid_spec=grid_spec,
        compiler_params=pltpu.CompilerParams(dimension_semantics=("arbitrary",)),
    )(obj_to_img.astype(jnp.int32),
      objs_col, imgs3, wyblk, wxt,
      w1full, b1tile, rsel, rselt, w2c, b2row, wfc, bfc, wh, bh)
    return real, loss[0, 0]


if __name__ == "__main__":
    key = jax.random.PRNGKey(0)
    k_img, k_box, k_obj, k_map, k_par = jax.random.split(key, 5)

    N, C, H, W = 2, 3, 16, 16          # imgs: NCHW
    B = 5                              # number of object crops
    num_objects = 7                    # len(vocab['object_idx_to_name'])
    object_size = 8

    imgs = jax.random.normal(k_img, (N, C, H, W), jnp.float32)
    r = jax.random.uniform(k_box, (B, 4), jnp.float32)
    x0 = r[:, 0] * 0.5
    y0 = r[:, 1] * 0.5
    x1 = x0 + 0.25 + r[:, 2] * 0.25
    y1 = y0 + 0.25 + r[:, 3] * 0.25
    boxes = jnp.stack([x0, y0, x1, y1], axis=1)                  # (B, 4) in [0, 1]
    objs = jax.random.randint(k_obj, (B,), 0, num_objects)       # (B,)
    obj_to_img = jax.random.randint(k_map, (B,), 0, N)           # (B,)

    params = init_params(k_par, num_objects)

    real_scores, ac_loss = obj_crop_discriminator_forward(
        params, imgs, objs, boxes, obj_to_img, object_size=object_size)
    jax.block_until_ready((real_scores, ac_loss))

    assert real_scores.shape == (B, 1)
    assert ac_loss.shape == ()
    assert bool(jnp.all(jnp.isfinite(real_scores))) and bool(jnp.isfinite(ac_loss))
    print("KERNEL_OK")
</pallas_src>

<mosaic_0001>
module attributes {stable_mosaic.version = 11 : i64} {
  func.func @_fused_kernel(%arg0: i32, %arg1: memref<5xi32, #tpu.memory_space<smem>>, %arg2: memref<5x1xi32, #tpu.memory_space<vmem>>, %arg3: memref<2x48x16xf32, #tpu.memory_space<vmem>>, %arg4: memref<5x24x48xf32, #tpu.memory_space<vmem>>, %arg5: memref<5x16x8xf32, #tpu.memory_space<vmem>>, %arg6: memref<192x72xf32, #tpu.memory_space<vmem>>, %arg7: memref<1x72xf32, #tpu.memory_space<vmem>>, %arg8: memref<72x8xf32, #tpu.memory_space<vmem>>, %arg9: memref<8x72xf32, #tpu.memory_space<vmem>>, %arg10: memref<72x16xf32, #tpu.memory_space<vmem>>, %arg11: memref<1x16xf32, #tpu.memory_space<vmem>>, %arg12: memref<16x1024xf32, #tpu.memory_space<vmem>>, %arg13: memref<1x1024xf32, #tpu.memory_space<vmem>>, %arg14: memref<1024x8xf32, #tpu.memory_space<vmem>>, %arg15: memref<1x8xf32, #tpu.memory_space<vmem>>, %arg16: memref<5x1xf32, #tpu.memory_space<vmem>>, %arg17: memref<1x1xf32, #tpu.memory_space<vmem>>, %arg18: memref<5x24x8xf32, #tpu.memory_space<vmem>>, %arg19: memref<5x192xf32, #tpu.memory_space<vmem>>) attributes {dimension_semantics = [#tpu.dimension_semantics<arbitrary>], iteration_bounds = array<i64: 1>, scalar_prefetch = 1 : i64, scratch_operands = 2 : i64, tpu.core_type = #tpu.core_type<tc>, window_params = [{pipeline_mode = #tpu.pipeline_mode<synchronous>, transform_indices = @transform_0, window_bounds = array<i64: 5, 1>}, {pipeline_mode = #tpu.pipeline_mode<synchronous>, transform_indices = @transform_1, window_bounds = array<i64: 2, 48, 16>}, {pipeline_mode = #tpu.pipeline_mode<synchronous>, transform_indices = @transform_2, window_bounds = array<i64: 5, 24, 48>}, {pipeline_mode = #tpu.pipeline_mode<synchronous>, transform_indices = @transform_3, window_bounds = array<i64: 5, 16, 8>}, {pipeline_mode = #tpu.pipeline_mode<synchronous>, transform_indices = @transform_4, window_bounds = array<i64: 192, 72>}, {pipeline_mode = #tpu.pipeline_mode<synchronous>, transform_indices = @transform_5, window_bounds = array<i64: 1, 72>}, {pipeline_mode = #tpu.pipeline_mode<synchronous>, transform_indices = @transform_6, window_bounds = array<i64: 72, 8>}, {pipeline_mode = #tpu.pipeline_mode<synchronous>, transform_indices = @transform_7, window_bounds = array<i64: 8, 72>}, {pipeline_mode = #tpu.pipeline_mode<synchronous>, transform_indices = @transform_8, window_bounds = array<i64: 72, 16>}, {pipeline_mode = #tpu.pipeline_mode<synchronous>, transform_indices = @transform_9, window_bounds = array<i64: 1, 16>}, {pipeline_mode = #tpu.pipeline_mode<synchronous>, transform_indices = @transform_10, window_bounds = array<i64: 16, 1024>}, {pipeline_mode = #tpu.pipeline_mode<synchronous>, transform_indices = @transform_11, window_bounds = array<i64: 1, 1024>}, {pipeline_mode = #tpu.pipeline_mode<synchronous>, transform_indices = @transform_12, window_bounds = array<i64: 1024, 8>}, {pipeline_mode = #tpu.pipeline_mode<synchronous>, transform_indices = @transform_13, window_bounds = array<i64: 1, 8>}, {pipeline_mode = #tpu.pipeline_mode<synchronous>, transform_indices = @transform_14, window_bounds = array<i64: 5, 1>}, {pipeline_mode = #tpu.pipeline_mode<synchronous>, transform_indices = @transform_15, window_bounds = array<i64: 1, 1>}]} {
    %c0 = arith.constant 0 : index
    %0 = memref.load %arg1[%c0] : memref<5xi32, #tpu.memory_space<smem>>
    %1 = arith.index_cast %0 : i32 to index
    %c0_0 = arith.constant 0 : index
    %c0_1 = arith.constant 0 : index
    %2 = vector.load %arg3[%1, %c0_0, %c0_1] : memref<2x48x16xf32, #tpu.memory_space<vmem>>, vector<1x48x16xf32>
    %3 = vector.shape_cast %2 : vector<1x48x16xf32> to vector<48x16xf32>
    %c0_2 = arith.constant 0 : index
    %c0_3 = arith.constant 0 : index
    %c0_4 = arith.constant 0 : index
    %4 = vector.load %arg5[%c0_2, %c0_3, %c0_4] : memref<5x16x8xf32, #tpu.memory_space<vmem>>, vector<1x16x8xf32>
    %5 = vector.shape_cast %4 : vector<1x16x8xf32> to vector<16x8xf32>
    %cst = arith.constant dense<0.000000e+00> : vector<48x8xf32>
    %6 = tpu.matmul %3, %5, %cst {dimension_numbers = #tpu.dot_dimension_numbers<[1], [0], [0], [1], [0, 0, 1, 1], [], []>} : vector<48x16xf32>, vector<16x8xf32>, vector<48x8xf32> -> vector<48x8xf32>
    %c0_5 = arith.constant 0 : index
    %c0_6 = arith.constant 0 : index
    %c0_7 = arith.constant 0 : index
    %7 = vector.load %arg4[%c0_5, %c0_6, %c0_7] : memref<5x24x48xf32, #tpu.memory_space<vmem>>, vector<1x24x48xf32>
    %8 = vector.shape_cast %7 : vector<1x24x48xf32> to vector<24x48xf32>
    %cst_8 = arith.constant dense<0.000000e+00> : vector<24x8xf32>
    %9 = tpu.matmul %8, %6, %cst_8 {dimension_numbers = #tpu.dot_dimension_numbers<[1], [0], [0], [1], [0, 0, 1, 1], [], []>} : vector<24x48xf32>, vector<48x8xf32>, vector<24x8xf32> -> vector<24x8xf32>
    %c0_9 = arith.constant 0 : index
    %c0_10 = arith.constant 0 : index
    %c0_11 = arith.constant 0 : index
    %10 = vector.load %arg18[%c0_9, %c0_10, %c0_11] : memref<5x24x8xf32, #tpu.memory_space<vmem>>, vector<1x24x8xf32>
    %11 = vector.shape_cast %10 : vector<1x24x8xf32> to vector<24x8xf32>
    %12 = vector.shape_cast %9 : vector<24x8xf32> to vector<1x24x8xf32>
    tpu.vector_store %arg18[%c0_9, %c0_10, %c0_11], %12 {strides = array<i32>} : memref<5x24x8xf32, #tpu.memory_space<vmem>>, vector<1x24x8xf32>,
    %c1 = arith.constant 1 : index
    %13 = memref.load %arg1[%c1] : memref<5xi32, #tpu.memory_space<smem>>
    %14 = arith.index_cast %13 : i32 to index
    %c0_12 = arith.constant 0 : index
    %c0_13 = arith.constant 0 : index
    %15 = vector.load %arg3[%14, %c0_12, %c0_13] : memref<2x48x16xf32, #tpu.memory_space<vmem>>, vector<1x48x16xf32>
    %16 = vector.shape_cast %15 : vector<1x48x16xf32> to vector<48x16xf32>
    %c1_14 = arith.constant 1 : index
    %c0_15 = arith.constant 0 : index
    %c0_16 = arith.constant 0 : index
    %17 = vector.load %arg5[%c1_14, %c0_15, %c0_16] : memref<5x16x8xf32, #tpu.memory_space<vmem>>, vector<1x16x8xf32>
    %18 = vector.shape_cast %17 : vector<1x16x8xf32> to vector<16x8xf32>
    %cst_17 = arith.constant dense<0.000000e+00> : vector<48x8xf32>
    %19 = tpu.matmul %16, %18, %cst_17 {dimension_numbers = #tpu.dot_dimension_numbers<[1], [0], [0], [1], [0, 0, 1, 1], [], []>} : vector<48x16xf32>, vector<16x8xf32>, vector<48x8xf32> -> vector<48x8xf32>
    %c1_18 = arith.constant 1 : index
    %c0_19 = arith.constant 0 : index
    %c0_20 = arith.constant 0 : index
    %20 = vector.load %arg4[%c1_18, %c0_19, %c0_20] : memref<5x24x48xf32, #tpu.memory_space<vmem>>, vector<1x24x48xf32>
    %21 = vector.shape_cast %20 : vector<1x24x48xf32> to vector<24x48xf32>
    %cst_21 = arith.constant dense<0.000000e+00> : vector<24x8xf32>
    %22 = tpu.matmul %21, %19, %cst_21 {dimension_numbers = #tpu.dot_dimension_numbers<[1], [0], [0], [1], [0, 0, 1, 1], [], []>} : vector<24x48xf32>, vector<48x8xf32>, vector<24x8xf32> -> vector<24x8xf32>
    %c1_22 = arith.constant 1 : index
    %c0_23 = arith.constant 0 : index
    %c0_24 = arith.constant 0 : index
    %23 = vector.load %arg18[%c1_22, %c0_23, %c0_24] : memref<5x24x8xf32, #tpu.memory_space<vmem>>, vector<1x24x8xf32>
    %24 = vector.shape_cast %23 : vector<1x24x8xf32> to vector<24x8xf32>
    %25 = vector.shape_cast %22 : vector<24x8xf32> to vector<1x24x8xf32>
    tpu.vector_store %arg18[%c1_22, %c0_23, %c0_24], %25 {strides = array<i32>} : memref<5x24x8xf32, #tpu.memory_space<vmem>>, vector<1x24x8xf32>,
    %c2 = arith.constant 2 : index
    %26 = memref.load %arg1[%c2] : memref<5xi32, #tpu.memory_space<smem>>
    %27 = arith.index_cast %26 : i32 to index
    %c0_25 = arith.constant 0 : index
    %c0_26 = arith.constant 0 : index
    %28 = vector.load %arg3[%27, %c0_25, %c0_26] : memref<2x48x16xf32, #tpu.memory_space<vmem>>, vector<1x48x16xf32>
    %29 = vector.shape_cast %28 : vector<1x48x16xf32> to vector<48x16xf32>
    %c2_27 = arith.constant 2 : index
    %c0_28 = arith.constant 0 : index
    %c0_29 = arith.constant 0 : index
    %30 = vector.load %arg5[%c2_27, %c0_28, %c0_29] : memref<5x16x8xf32, #tpu.memory_space<vmem>>, vector<1x16x8xf32>
    %31 = vector.shape_cast %30 : vector<1x16x8xf32> to vector<16x8xf32>
    %cst_30 = arith.constant dense<0.000000e+00> : vector<48x8xf32>
    %32 = tpu.matmul %29, %31, %cst_30 {dimension_numbers = #tpu.dot_dimension_numbers<[1], [0], [0], [1], [0, 0, 1, 1], [], []>} : vector<48x16xf32>, vector<16x8xf32>, vector<48x8xf32> -> vector<48x8xf32>
    %c2_31 = arith.constant 2 : index
    %c0_32 = arith.constant 0 : index
    %c0_33 = arith.constant 0 : index
    %33 = vector.load %arg4[%c2_31, %c0_32, %c0_33] : memref<5x24x48xf32, #tpu.memory_space<vmem>>, vector<1x24x48xf32>
    %34 = vector.shape_cast %33 : vector<1x24x48xf32> to vector<24x48xf32>
    %cst_34 = arith.constant dense<0.000000e+00> : vector<24x8xf32>
    %35 = tpu.matmul %34, %32, %cst_34 {dimension_numbers = #tpu.dot_dimension_numbers<[1], [0], [0], [1], [0, 0, 1, 1], [], []>} : vector<24x48xf32>, vector<48x8xf32>, vector<24x8xf32> -> vector<24x8xf32>
    %c2_35 = arith.constant 2 : index
    %c0_36 = arith.constant 0 : index
    %c0_37 = arith.constant 0 : index
    %36 = vector.load %arg18[%c2_35, %c0_36, %c0_37] : memref<5x24x8xf32, #tpu.memory_space<vmem>>, vector<1x24x8xf32>
    %37 = vector.shape_cast %36 : vector<1x24x8xf32> to vector<24x8xf32>
    %38 = vector.shape_cast %35 : vector<24x8xf32> to vector<1x24x8xf32>
    tpu.vector_store %arg18[%c2_35, %c0_36, %c0_37], %38 {strides = array<i32>} : memref<5x24x8xf32, #tpu.memory_space<vmem>>, vector<1x24x8xf32>,
    %c3 = arith.constant 3 : index
    %39 = memref.load %arg1[%c3] : memref<5xi32, #tpu.memory_space<smem>>
    %40 = arith.index_cast %39 : i32 to index
    %c0_38 = arith.constant 0 : index
    %c0_39 = arith.constant 0 : index
    %41 = vector.load %arg3[%40, %c0_38, %c0_39] : memref<2x48x16xf32, #tpu.memory_space<vmem>>, vector<1x48x16xf32>
    %42 = vector.shape_cast %41 : vector<1x48x16xf32> to vector<48x16xf32>
    %c3_40 = arith.constant 3 : index
    %c0_41 = arith.constant 0 : index
    %c0_42 = arith.constant 0 : index
    %43 = vector.load %arg5[%c3_40, %c0_41, %c0_42] : memref<5x16x8xf32, #tpu.memory_space<vmem>>, vector<1x16x8xf32>
    %44 = vector.shape_cast %43 : vector<1x16x8xf32> to vector<16x8xf32>
    %cst_43 = arith.constant dense<0.000000e+00> : vector<48x8xf32>
    %45 = tpu.matmul %42, %44, %cst_43 {dimension_numbers = #tpu.dot_dimension_numbers<[1], [0], [0], [1], [0, 0, 1, 1], [], []>} : vector<48x16xf32>, vector<16x8xf32>, vector<48x8xf32> -> vector<48x8xf32>
    %c3_44 = arith.constant 3 : index
    %c0_45 = arith.constant 0 : index
    %c0_46 = arith.constant 0 : index
    %46 = vector.load %arg4[%c3_44, %c0_45, %c0_46] : memref<5x24x48xf32, #tpu.memory_space<vmem>>, vector<1x24x48xf32>
    %47 = vector.shape_cast %46 : vector<1x24x48xf32> to vector<24x48xf32>
    %cst_47 = arith.constant dense<0.000000e+00> : vector<24x8xf32>
    %48 = tpu.matmul %47, %45, %cst_47 {dimension_numbers = #tpu.dot_dimension_numbers<[1], [0], [0], [1], [0, 0, 1, 1], [], []>} : vector<24x48xf32>, vector<48x8xf32>, vector<24x8xf32> -> vector<24x8xf32>
    %c3_48 = arith.constant 3 : index
    %c0_49 = arith.constant 0 : index
    %c0_50 = arith.constant 0 : index
    %49 = vector.load %arg18[%c3_48, %c0_49, %c0_50] : memref<5x24x8xf32, #tpu.memory_space<vmem>>, vector<1x24x8xf32>
    %50 = vector.shape_cast %49 : vector<1x24x8xf32> to vector<24x8xf32>
    %51 = vector.shape_cast %48 : vector<24x8xf32> to vector<1x24x8xf32>
    tpu.vector_store %arg18[%c3_48, %c0_49, %c0_50], %51 {strides = array<i32>} : memref<5x24x8xf32, #tpu.memory_space<vmem>>, vector<1x24x8xf32>,
    %c4 = arith.constant 4 : index
    %52 = memref.load %arg1[%c4] : memref<5xi32, #tpu.memory_space<smem>>
    %53 = arith.index_cast %52 : i32 to index
    %c0_51 = arith.constant 0 : index
    %c0_52 = arith.constant 0 : index
    %54 = vector.load %arg3[%53, %c0_51, %c0_52] : memref<2x48x16xf32, #tpu.memory_space<vmem>>, vector<1x48x16xf32>
    %55 = vector.shape_cast %54 : vector<1x48x16xf32> to vector<48x16xf32>
    %c4_53 = arith.constant 4 : index
    %c0_54 = arith.constant 0 : index
    %c0_55 = arith.constant 0 : index
    %56 = vector.load %arg5[%c4_53, %c0_54, %c0_55] : memref<5x16x8xf32, #tpu.memory_space<vmem>>, vector<1x16x8xf32>
    %57 = vector.shape_cast %56 : vector<1x16x8xf32> to vector<16x8xf32>
    %cst_56 = arith.constant dense<0.000000e+00> : vector<48x8xf32>
    %58 = tpu.matmul %55, %57, %cst_56 {dimension_numbers = #tpu.dot_dimension_numbers<[1], [0], [0], [1], [0, 0, 1, 1], [], []>} : vector<48x16xf32>, vector<16x8xf32>, vector<48x8xf32> -> vector<48x8xf32>
    %c4_57 = arith.constant 4 : index
    %c0_58 = arith.constant 0 : index
    %c0_59 = arith.constant 0 : index
    %59 = vector.load %arg4[%c4_57, %c0_58, %c0_59] : memref<5x24x48xf32, #tpu.memory_space<vmem>>, vector<1x24x48xf32>
    %60 = vector.shape_cast %59 : vector<1x24x48xf32> to vector<24x48xf32>
    %cst_60 = arith.constant dense<0.000000e+00> : vector<24x8xf32>
    %61 = tpu.matmul %60, %58, %cst_60 {dimension_numbers = #tpu.dot_dimension_numbers<[1], [0], [0], [1], [0, 0, 1, 1], [], []>} : vector<24x48xf32>, vector<48x8xf32>, vector<24x8xf32> -> vector<24x8xf32>
    %c4_61 = arith.constant 4 : index
    %c0_62 = arith.constant 0 : index
    %c0_63 = arith.constant 0 : index
    %62 = vector.load %arg18[%c4_61, %c0_62, %c0_63] : memref<5x24x8xf32, #tpu.memory_space<vmem>>, vector<1x24x8xf32>
    %63 = vector.shape_cast %62 : vector<1x24x8xf32> to vector<24x8xf32>
    %64 = vector.shape_cast %61 : vector<24x8xf32> to vector<1x24x8xf32>
    tpu.vector_store %arg18[%c4_61, %c0_62, %c0_63], %64 {strides = array<i32>} : memref<5x24x8xf32, #tpu.memory_space<vmem>>, vector<1x24x8xf32>,
    %c0_64 = arith.constant 0 : index
    %c0_65 = arith.constant 0 : index
    %c0_66 = arith.constant 0 : index
    %65 = vector.load %arg18[%c0_64, %c0_65, %c0_66] : memref<5x24x8xf32, #tpu.memory_space<vmem>>, vector<5x24x8xf32>
    %66 = vector.extract_strided_slice %65 {offsets = [0, 0, 0], sizes = [5, 1, 8], strides = [1, 1, 1]} : vector<5x24x8xf32> to vector<5x1x8xf32>
    %67 = vector.shape_cast %66 : vector<5x1x8xf32> to vector<5x8xf32>
    %c0_67 = arith.constant 0 : index
    %c0_68 = arith.constant 0 : index
    %68 = vector.load %arg19[%c0_67, %c0_68] : memref<5x192xf32, #tpu.memory_space<vmem>>, vector<5x8xf32>
    tpu.vector_store %arg19[%c0_67, %c0_68], %67 {strides = array<i32>} : memref<5x192xf32, #tpu.memory_space<vmem>>, vector<5x8xf32>,
    %69 = vector.extract_strided_slice %65 {offsets = [0, 1, 0], sizes = [5, 1, 8], strides = [1, 1, 1]} : vector<5x24x8xf32> to vector<5x1x8xf32>
    %70 = vector.shape_cast %69 : vector<5x1x8xf32> to vector<5x8xf32>
    %c0_69 = arith.constant 0 : index
    %c8 = arith.constant 8 : index
    %71 = vector.load %arg19[%c0_69, %c8] : memref<5x192xf32, #tpu.memory_space<vmem>>, vector<5x8xf32>
    tpu.vector_store %arg19[%c0_69, %c8], %70 {strides = array<i32>} : memref<5x192xf32, #tpu.memory_space<vmem>>, vector<5x8xf32>,
    %72 = vector.extract_strided_slice %65 {offsets = [0, 2, 0], sizes = [5, 1, 8], strides = [1, 1, 1]} : vector<5x24x8xf32> to vector<5x1x8xf32>
    %73 = vector.shape_cast %72 : vector<5x1x8xf32> to vector<5x8xf32>
    %c0_70 = arith.constant 0 : index
    %c16 = arith.constant 16 : index
    %74 = vector.load %arg19[%c0_70, %c16] : memref<5x192xf32, #tpu.memory_space<vmem>>, vector<5x8xf32>
    tpu.vector_store %arg19[%c0_70, %c16], %73 {strides = array<i32>} : memref<5x192xf32, #tpu.memory_space<vmem>>, vector<5x8xf32>,
    %75 = vector.extract_strided_slice %65 {offsets = [0, 3, 0], sizes = [5, 1, 8], strides = [1, 1, 1]} : vector<5x24x8xf32> to vector<5x1x8xf32>
    %76 = vector.shape_cast %75 : vector<5x1x8xf32> to vector<5x8xf32>
    %c0_71 = arith.constant 0 : index
    %c24 = arith.constant 24 : index
    %77 = vector.load %arg19[%c0_71, %c24] : memref<5x192xf32, #tpu.memory_space<vmem>>, vector<5x8xf32>
    tpu.vector_store %arg19[%c0_71, %c24], %76 {strides = array<i32>} : memref<5x192xf32, #tpu.memory_space<vmem>>, vector<5x8xf32>,
    %78 = vector.extract_strided_slice %65 {offsets = [0, 4, 0], sizes = [5, 1, 8], strides = [1, 1, 1]} : vector<5x24x8xf32> to vector<5x1x8xf32>
    %79 = vector.shape_cast %78 : vector<5x1x8xf32> to vector<5x8xf32>
    %c0_72 = arith.constant 0 : index
    %c32 = arith.constant 32 : index
    %80 = vector.load %arg19[%c0_72, %c32] : memref<5x192xf32, #tpu.memory_space<vmem>>, vector<5x8xf32>
    tpu.vector_store %arg19[%c0_72, %c32], %79 {strides = array<i32>} : memref<5x192xf32, #tpu.memory_space<vmem>>, vector<5x8xf32>,
    %81 = vector.extract_strided_slice %65 {offsets = [0, 5, 0], sizes = [5, 1, 8], strides = [1, 1, 1]} : vector<5x24x8xf32> to vector<5x1x8xf32>
    %82 = vector.shape_cast %81 : vector<5x1x8xf32> to vector<5x8xf32>
    %c0_73 = arith.constant 0 : index
    %c40 = arith.constant 40 : index
    %83 = vector.load %arg19[%c0_73, %c40] : memref<5x192xf32, #tpu.memory_space<vmem>>, vector<5x8xf32>
    tpu.vector_store %arg19[%c0_73, %c40], %82 {strides = array<i32>} : memref<5x192xf32, #tpu.memory_space<vmem>>, vector<5x8xf32>,
    %84 = vector.extract_strided_slice %65 {offsets = [0, 6, 0], sizes = [5, 1, 8], strides = [1, 1, 1]} : vector<5x24x8xf32> to vector<5x1x8xf32>
    %85 = vector.shape_cast %84 : vector<5x1x8xf32> to vector<5x8xf32>
    %c0_74 = arith.constant 0 : index
    %c48 = arith.constant 48 : index
    %86 = vector.load %arg19[%c0_74, %c48] : memref<5x192xf32, #tpu.memory_space<vmem>>, vector<5x8xf32>
    tpu.vector_store %arg19[%c0_74, %c48], %85 {strides = array<i32>} : memref<5x192xf32, #tpu.memory_space<vmem>>, vector<5x8xf32>,
    %87 = vector.extract_strided_slice %65 {offsets = [0, 7, 0], sizes = [5, 1, 8], strides = [1, 1, 1]} : vector<5x24x8xf32> to vector<5x1x8xf32>
    %88 = vector.shape_cast %87 : vector<5x1x8xf32> to vector<5x8xf32>
    %c0_75 = arith.constant 0 : index
    %c56 = arith.constant 56 : index
    %89 = vector.load %arg19[%c0_75, %c56] : memref<5x192xf32, #tpu.memory_space<vmem>>, vector<5x8xf32>
    tpu.vector_store %arg19[%c0_75, %c56], %88 {strides = array<i32>} : memref<5x192xf32, #tpu.memory_space<vmem>>, vector<5x8xf32>,
    %90 = vector.extract_strided_slice %65 {offsets = [0, 8, 0], sizes = [5, 1, 8], strides = [1, 1, 1]} : vector<5x24x8xf32> to vector<5x1x8xf32>
    %91 = vector.shape_cast %90 : vector<5x1x8xf32> to vector<5x8xf32>
    %c0_76 = arith.constant 0 : index
    %c64 = arith.constant 64 : index
    %92 = vector.load %arg19[%c0_76, %c64] : memref<5x192xf32, #tpu.memory_space<vmem>>, vector<5x8xf32>
    tpu.vector_store %arg19[%c0_76, %c64], %91 {strides = array<i32>} : memref<5x192xf32, #tpu.memory_space<vmem>>, vector<5x8xf32>,
    %93 = vector.extract_strided_slice %65 {offsets = [0, 9, 0], sizes = [5, 1, 8], strides = [1, 1, 1]} : vector<5x24x8xf32> to vector<5x1x8xf32>
    %94 = vector.shape_cast %93 : vector<5x1x8xf32> to vector<5x8xf32>
    %c0_77 = arith.constant 0 : index
    %c72 = arith.constant 72 : index
    %95 = vector.load %arg19[%c0_77, %c72] : memref<5x192xf32, #tpu.memory_space<vmem>>, vector<5x8xf32>
    tpu.vector_store %arg19[%c0_77, %c72], %94 {strides = array<i32>} : memref<5x192xf32, #tpu.memory_space<vmem>>, vector<5x8xf32>,
    %96 = vector.extract_strided_slice %65 {offsets = [0, 10, 0], sizes = [5, 1, 8], strides = [1, 1, 1]} : vector<5x24x8xf32> to vector<5x1x8xf32>
    %97 = vector.shape_cast %96 : vector<5x1x8xf32> to vector<5x8xf32>
    %c0_78 = arith.constant 0 : index
    %c80 = arith.constant 80 : index
    %98 = vector.load %arg19[%c0_78, %c80] : memref<5x192xf32, #tpu.memory_space<vmem>>, vector<5x8xf32>
    tpu.vector_store %arg19[%c0_78, %c80], %97 {strides = array<i32>} : memref<5x192xf32, #tpu.memory_space<vmem>>, vector<5x8xf32>,
    %99 = vector.extract_strided_slice %65 {offsets = [0, 11, 0], sizes = [5, 1, 8], strides = [1, 1, 1]} : vector<5x24x8xf32> to vector<5x1x8xf32>
    %100 = vector.shape_cast %99 : vector<5x1x8xf32> to vector<5x8xf32>
    %c0_79 = arith.constant 0 : index
    %c88 = arith.constant 88 : index
    %101 = vector.load %arg19[%c0_79, %c88] : memref<5x192xf32, #tpu.memory_space<vmem>>, vector<5x8xf32>
    tpu.vector_store %arg19[%c0_79, %c88], %100 {strides = array<i32>} : memref<5x192xf32, #tpu.memory_space<vmem>>, vector<5x8xf32>,
    %102 = vector.extract_strided_slice %65 {offsets = [0, 12, 0], sizes = [5, 1, 8], strides = [1, 1, 1]} : vector<5x24x8xf32> to vector<5x1x8xf32>
    %103 = vector.shape_cast %102 : vector<5x1x8xf32> to vector<5x8xf32>
    %c0_80 = arith.constant 0 : index
    %c96 = arith.constant 96 : index
    %104 = vector.load %arg19[%c0_80, %c96] : memref<5x192xf32, #tpu.memory_space<vmem>>, vector<5x8xf32>
    tpu.vector_store %arg19[%c0_80, %c96], %103 {strides = array<i32>} : memref<5x192xf32, #tpu.memory_space<vmem>>, vector<5x8xf32>,
    %105 = vector.extract_strided_slice %65 {offsets = [0, 13, 0], sizes = [5, 1, 8], strides = [1, 1, 1]} : vector<5x24x8xf32> to vector<5x1x8xf32>
    %106 = vector.shape_cast %105 : vector<5x1x8xf32> to vector<5x8xf32>
    %c0_81 = arith.constant 0 : index
    %c104 = arith.constant 104 : index
    %107 = vector.load %arg19[%c0_81, %c104] : memref<5x192xf32, #tpu.memory_space<vmem>>, vector<5x8xf32>
    tpu.vector_store %arg19[%c0_81, %c104], %106 {strides = array<i32>} : memref<5x192xf32, #tpu.memory_space<vmem>>, vector<5x8xf32>,
    %108 = vector.extract_strided_slice %65 {offsets = [0, 14, 0], sizes = [5, 1, 8], strides = [1, 1, 1]} : vector<5x24x8xf32> to vector<5x1x8xf32>
    %109 = vector.shape_cast %108 : vector<5x1x8xf32> to vector<5x8xf32>
    %c0_82 = arith.constant 0 : index
    %c112 = arith.constant 112 : index
    %110 = vector.load %arg19[%c0_82, %c112] : memref<5x192xf32, #tpu.memory_space<vmem>>, vector<5x8xf32>
    tpu.vector_store %arg19[%c0_82, %c112], %109 {strides = array<i32>} : memref<5x192xf32, #tpu.memory_space<vmem>>, vector<5x8xf32>,
    %111 = vector.extract_strided_slice %65 {offsets = [0, 15, 0], sizes = [5, 1, 8], strides = [1, 1, 1]} : vector<5x24x8xf32> to vector<5x1x8xf32>
    %112 = vector.shape_cast %111 : vector<5x1x8xf32> to vector<5x8xf32>
    %c0_83 = arith.constant 0 : index
    %c120 = arith.constant 120 : index
    %113 = vector.load %arg19[%c0_83, %c120] : memref<5x192xf32, #tpu.memory_space<vmem>>, vector<5x8xf32>
    tpu.vector_store %arg19[%c0_83, %c120], %112 {strides = array<i32>} : memref<5x192xf32, #tpu.memory_space<vmem>>, vector<5x8xf32>,
    %114 = vector.extract_strided_slice %65 {offsets = [0, 16, 0], sizes = [5, 1, 8], strides = [1, 1, 1]} : vector<5x24x8xf32> to vector<5x1x8xf32>
    %115 = vector.shape_cast %114 : vector<5x1x8xf32> to vector<5x8xf32>
    %c0_84 = arith.constant 0 : index
    %c128 = arith.constant 128 : index
    %116 = vector.load %arg19[%c0_84, %c128] : memref<5x192xf32, #tpu.memory_space<vmem>>, vector<5x8xf32>
    tpu.vector_store %arg19[%c0_84, %c128], %115 {strides = array<i32>} : memref<5x192xf32, #tpu.memory_space<vmem>>, vector<5x8xf32>,
    %117 = vector.extract_strided_slice %65 {offsets = [0, 17, 0], sizes = [5, 1, 8], strides = [1, 1, 1]} : vector<5x24x8xf32> to vector<5x1x8xf32>
    %118 = vector.shape_cast %117 : vector<5x1x8xf32> to vector<5x8xf32>
    %c0_85 = arith.constant 0 : index
    %c136 = arith.constant 136 : index
    %119 = vector.load %arg19[%c0_85, %c136] : memref<5x192xf32, #tpu.memory_space<vmem>>, vector<5x8xf32>
    tpu.vector_store %arg19[%c0_85, %c136], %118 {strides = array<i32>} : memref<5x192xf32, #tpu.memory_space<vmem>>, vector<5x8xf32>,
    %120 = vector.extract_strided_slice %65 {offsets = [0, 18, 0], sizes = [5, 1, 8], strides = [1, 1, 1]} : vector<5x24x8xf32> to vector<5x1x8xf32>
    %121 = vector.shape_cast %120 : vector<5x1x8xf32> to vector<5x8xf32>
    %c0_86 = arith.constant 0 : index
    %c144 = arith.constant 144 : index
    %122 = vector.load %arg19[%c0_86, %c144] : memref<5x192xf32, #tpu.memory_space<vmem>>, vector<5x8xf32>
    tpu.vector_store %arg19[%c0_86, %c144], %121 {strides = array<i32>} : memref<5x192xf32, #tpu.memory_space<vmem>>, vector<5x8xf32>,
    %123 = vector.extract_strided_slice %65 {offsets = [0, 19, 0], sizes = [5, 1, 8], strides = [1, 1, 1]} : vector<5x24x8xf32> to vector<5x1x8xf32>
    %124 = vector.shape_cast %123 : vector<5x1x8xf32> to vector<5x8xf32>
    %c0_87 = arith.constant 0 : index
    %c152 = arith.constant 152 : index
    %125 = vector.load %arg19[%c0_87, %c152] : memref<5x192xf32, #tpu.memory_space<vmem>>, vector<5x8xf32>
    tpu.vector_store %arg19[%c0_87, %c152], %124 {strides = array<i32>} : memref<5x192xf32, #tpu.memory_space<vmem>>, vector<5x8xf32>,
    %126 = vector.extract_strided_slice %65 {offsets = [0, 20, 0], sizes = [5, 1, 8], strides = [1, 1, 1]} : vector<5x24x8xf32> to vector<5x1x8xf32>
    %127 = vector.shape_cast %126 : vector<5x1x8xf32> to vector<5x8xf32>
    %c0_88 = arith.constant 0 : index
    %c160 = arith.constant 160 : index
    %128 = vector.load %arg19[%c0_88, %c160] : memref<5x192xf32, #tpu.memory_space<vmem>>, vector<5x8xf32>
    tpu.vector_store %arg19[%c0_88, %c160], %127 {strides = array<i32>} : memref<5x192xf32, #tpu.memory_space<vmem>>, vector<5x8xf32>,
    %129 = vector.extract_strided_slice %65 {offsets = [0, 21, 0], sizes = [5, 1, 8], strides = [1, 1, 1]} : vector<5x24x8xf32> to vector<5x1x8xf32>
    %130 = vector.shape_cast %129 : vector<5x1x8xf32> to vector<5x8xf32>
    %c0_89 = arith.constant 0 : index
    %c168 = arith.constant 168 : index
    %131 = vector.load %arg19[%c0_89, %c168] : memref<5x192xf32, #tpu.memory_space<vmem>>, vector<5x8xf32>
    tpu.vector_store %arg19[%c0_89, %c168], %130 {strides = array<i32>} : memref<5x192xf32, #tpu.memory_space<vmem>>, vector<5x8xf32>,
    %132 = vector.extract_strided_slice %65 {offsets = [0, 22, 0], sizes = [5, 1, 8], strides = [1, 1, 1]} : vector<5x24x8xf32> to vector<5x1x8xf32>
    %133 = vector.shape_cast %132 : vector<5x1x8xf32> to vector<5x8xf32>
    %c0_90 = arith.constant 0 : index
    %c176 = arith.constant 176 : index
    %134 = vector.load %arg19[%c0_90, %c176] : memref<5x192xf32, #tpu.memory_space<vmem>>, vector<5x8xf32>
    tpu.vector_store %arg19[%c0_90, %c176], %133 {strides = array<i32>} : memref<5x192xf32, #tpu.memory_space<vmem>>, vector<5x8xf32>,
    %135 = vector.extract_strided_slice %65 {offsets = [0, 23, 0], sizes = [5, 1, 8], strides = [1, 1, 1]} : vector<5x24x8xf32> to vector<5x1x8xf32>
    %136 = vector.shape_cast %135 : vector<5x1x8xf32> to vector<5x8xf32>
    %c0_91 = arith.constant 0 : index
    %c184 = arith.constant 184 : index
    %137 = vector.load %arg19[%c0_91, %c184] : memref<5x192xf32, #tpu.memory_space<vmem>>, vector<5x8xf32>
    tpu.vector_store %arg19[%c0_91, %c184], %136 {strides = array<i32>} : memref<5x192xf32, #tpu.memory_space<vmem>>, vector<5x8xf32>,
    %c0_92 = arith.constant 0 : index
    %c0_93 = arith.constant 0 : index
    %138 = vector.load %arg19[%c0_92, %c0_93] : memref<5x192xf32, #tpu.memory_space<vmem>>, vector<5x192xf32>
    %c0_94 = arith.constant 0 : index
    %c0_95 = arith.constant 0 : index
    %139 = vector.load %arg6[%c0_94, %c0_95] : memref<192x72xf32, #tpu.memory_space<vmem>>, vector<192x72xf32>
    %cst_96 = arith.constant dense<0.000000e+00> : vector<5x72xf32>
    %140 = tpu.matmul %138, %139, %cst_96 {dimension_numbers = #tpu.dot_dimension_numbers<[1], [0], [0], [1], [0, 0, 1, 1], [], []>} : vector<5x192xf32>, vector<192x72xf32>, vector<5x72xf32> -> vector<5x72xf32>
    %c0_97 = arith.constant 0 : index
    %c0_98 = arith.constant 0 : index
    %141 = vector.load %arg7[%c0_97, %c0_98] : memref<1x72xf32, #tpu.memory_space<vmem>>, vector<1x72xf32>
    %142 = vector.broadcast %141 : vector<1x72xf32> to vector<5x72xf32>
    %143 = arith.addf %140, %142 : vector<5x72xf32>
    %cst_99 = arith.constant dense<0.000000e+00> : vector<72xf32>
    %144 = vector.multi_reduction <add>, %143, %cst_99 [0] : vector<5x72xf32> to vector<72xf32>
    %145 = vector.shape_cast %144 : vector<72xf32> to vector<1x72xf32>
    %c0_100 = arith.constant 0 : index
    %c0_101 = arith.constant 0 : index
    %146 = vector.load %arg8[%c0_100, %c0_101] : memref<72x8xf32, #tpu.memory_space<vmem>>, vector<72x8xf32>
    %cst_102 = arith.constant dense<0.000000e+00> : vector<1x8xf32>
    %147 = tpu.matmul %145, %146, %cst_102 {dimension_numbers = #tpu.dot_dimension_numbers<[1], [0], [0], [1], [0, 0, 1, 1], [], []>} : vector<1x72xf32>, vector<72x8xf32>, vector<1x8xf32> -> vector<1x8xf32>
    %cst_103 = arith.constant 4.500000e+01 : f32
    %148 = vector.broadcast %cst_103 : f32 to vector<1x8xf32>
    %149 = arith.divf %147, %148 : vector<1x8xf32>
    %c0_104 = arith.constant 0 : index
    %c0_105 = arith.constant 0 : index
    %150 = vector.load %arg9[%c0_104, %c0_105] : memref<8x72xf32, #tpu.memory_space<vmem>>, vector<8x72xf32>
    %cst_106 = arith.constant dense<0.000000e+00> : vector<1x72xf32>
    %151 = tpu.matmul %149, %150, %cst_106 {dimension_numbers = #tpu.dot_dimension_numbers<[1], [0], [0], [1], [0, 0, 1, 1], [], []>} : vector<1x8xf32>, vector<8x72xf32>, vector<1x72xf32> -> vector<1x72xf32>
    %152 = vector.broadcast %151 : vector<1x72xf32> to vector<5x72xf32>
    %153 = arith.subf %143, %152 : vector<5x72xf32>
    %154 = arith.mulf %153, %153 : vector<5x72xf32>
    %cst_107 = arith.constant dense<0.000000e+00> : vector<72xf32>
    %155 = vector.multi_reduction <add>, %154, %cst_107 [0] : vector<5x72xf32> to vector<72xf32>
    %156 = vector.shape_cast %155 : vector<72xf32> to vector<1x72xf32>
    %c0_108 = arith.constant 0 : index
    %c0_109 = arith.constant 0 : index
    %157 = vector.load %arg8[%c0_108, %c0_109] : memref<72x8xf32, #tpu.memory_space<vmem>>, vector<72x8xf32>
    %cst_110 = arith.constant dense<0.000000e+00> : vector<1x8xf32>
    %158 = tpu.matmul %156, %157, %cst_110 {dimension_numbers = #tpu.dot_dimension_numbers<[1], [0], [0], [1], [0, 0, 1, 1], [], []>} : vector<1x72xf32>, vector<72x8xf32>, vector<1x8xf32> -> vector<1x8xf32>
    %cst_111 = arith.constant 4.500000e+01 : f32
    %159 = vector.broadcast %cst_111 : f32 to vector<1x8xf32>
    %160 = arith.divf %158, %159 : vector<1x8xf32>
    %cst_112 = arith.constant 9.99999974E-6 : f32
    %161 = vector.broadcast %cst_112 : f32 to vector<1x8xf32>
    %162 = arith.addf %160, %161 : vector<1x8xf32>
    %163 = math.rsqrt %162 : vector<1x8xf32>
    %c0_113 = arith.constant 0 : index
    %c0_114 = arith.constant 0 : index
    %164 = vector.load %arg9[%c0_113, %c0_114] : memref<8x72xf32, #tpu.memory_space<vmem>>, vector<8x72xf32>
    %cst_115 = arith.constant dense<0.000000e+00> : vector<1x72xf32>
    %165 = tpu.matmul %163, %164, %cst_115 {dimension_numbers = #tpu.dot_dimension_numbers<[1], [0], [0], [1], [0, 0, 1, 1], [], []>} : vector<1x8xf32>, vector<8x72xf32>, vector<1x72xf32> -> vector<1x72xf32>
    %166 = vector.broadcast %165 : vector<1x72xf32> to vector<5x72xf32>
    %167 = arith.mulf %153, %166 : vector<5x72xf32>
    %cst_116 = arith.constant 0.000000e+00 : f32
    %168 = vector.broadcast %cst_116 : f32 to vector<5x72xf32>
    %169 = arith.cmpf oge, %167, %168 : vector<5x72xf32>
    %cst_117 = arith.constant 0.00999999977 : f32
    %170 = vector.broadcast %cst_117 : f32 to vector<5x72xf32>
    %171 = arith.mulf %170, %167 : vector<5x72xf32>
    %172 = arith.select %169, %167, %171 : vector<5x72xi1>, vector<5x72xf32>
    %c0_118 = arith.constant 0 : index
    %c0_119 = arith.constant 0 : index
    %173 = vector.load %arg10[%c0_118, %c0_119] : memref<72x16xf32, #tpu.memory_space<vmem>>, vector<72x16xf32>
    %cst_120 = arith.constant dense<0.000000e+00> : vector<5x16xf32>
    %174 = tpu.matmul %172, %173, %cst_120 {dimension_numbers = #tpu.dot_dimension_numbers<[1], [0], [0], [1], [0, 0, 1, 1], [], []>} : vector<5x72xf32>, vector<72x16xf32>, vector<5x16xf32> -> vector<5x16xf32>
    %c0_121 = arith.constant 0 : index
    %c0_122 = arith.constant 0 : index
    %175 = vector.load %arg11[%c0_121, %c0_122] : memref<1x16xf32, #tpu.memory_space<vmem>>, vector<1x16xf32>
    %176 = vector.broadcast %175 : vector<1x16xf32> to vector<5x16xf32>
    %177 = arith.addf %174, %176 : vector<5x16xf32>
    %c0_123 = arith.constant 0 : index
    %c0_124 = arith.constant 0 : index
    %178 = vector.load %arg12[%c0_123, %c0_124] : memref<16x1024xf32, #tpu.memory_space<vmem>>, vector<16x1024xf32>
    %cst_125 = arith.constant dense<0.000000e+00> : vector<5x1024xf32>
    %179 = tpu.matmul %177, %178, %cst_125 {dimension_numbers = #tpu.dot_dimension_numbers<[1], [0], [0], [1], [0, 0, 1, 1], [], []>} : vector<5x16xf32>, vector<16x1024xf32>, vector<5x1024xf32> -> vector<5x1024xf32>
    %c0_126 = arith.constant 0 : index
    %c0_127 = arith.constant 0 : index
    %180 = vector.load %arg13[%c0_126, %c0_127] : memref<1x1024xf32, #tpu.memory_space<vmem>>, vector<1x1024xf32>
    %181 = vector.broadcast %180 : vector<1x1024xf32> to vector<5x1024xf32>
    %182 = arith.addf %179, %181 : vector<5x1024xf32>
    %c0_128 = arith.constant 0 : index
    %c0_129 = arith.constant 0 : index
    %183 = vector.load %arg14[%c0_128, %c0_129] : memref<1024x8xf32, #tpu.memory_space<vmem>>, vector<1024x8xf32>
    %cst_130 = arith.constant dense<0.000000e+00> : vector<5x8xf32>
    %184 = tpu.matmul %182, %183, %cst_130 {dimension_numbers = #tpu.dot_dimension_numbers<[1], [0], [0], [1], [0, 0, 1, 1], [], []>} : vector<5x1024xf32>, vector<1024x8xf32>, vector<5x8xf32> -> vector<5x8xf32>
    %c0_131 = arith.constant 0 : index
    %c0_132 = arith.constant 0 : index
    %185 = vector.load %arg15[%c0_131, %c0_132] : memref<1x8xf32, #tpu.memory_space<vmem>>, vector<1x8xf32>
    %186 = vector.broadcast %185 : vector<1x8xf32> to vector<5x8xf32>
    %187 = arith.addf %184, %186 : vector<5x8xf32>
    %188 = vector.extract_strided_slice %187 {offsets = [0, 0], sizes = [5, 1], strides = [1, 1]} : vector<5x8xf32> to vector<5x1xf32>
    %c0_133 = arith.constant 0 : index
    %c0_134 = arith.constant 0 : index
    %189 = vector.load %arg16[%c0_133, %c0_134] : memref<5x1xf32, #tpu.memory_space<vmem>>, vector<5x1xf32>
    tpu.vector_store %arg16[%c0_133, %c0_134], %188 {strides = array<i32>} : memref<5x1xf32, #tpu.memory_space<vmem>>, vector<5x1xf32>,
    %190 = vector.extract_strided_slice %187 {offsets = [0, 1], sizes = [5, 7], strides = [1, 1]} : vector<5x8xf32> to vector<5x7xf32>
    %cst_135 = arith.constant dense<0xFF800000> : vector<5xf32>
    %191 = vector.multi_reduction <maximumf>, %190, %cst_135 [1] : vector<5x7xf32> to vector<5xf32>
    %192 = vector.shape_cast %191 : vector<5xf32> to vector<5x1xf32>
    %193 = vector.broadcast %192 : vector<5x1xf32> to vector<5x7xf32>
    %194 = arith.subf %190, %193 : vector<5x7xf32>
    %195 = math.exp %194 : vector<5x7xf32>
    %cst_136 = arith.constant dense<0.000000e+00> : vector<5xf32>
    %196 = vector.multi_reduction <add>, %195, %cst_136 [1] : vector<5x7xf32> to vector<5xf32>
    %197 = vector.shape_cast %196 : vector<5xf32> to vector<5x1xf32>
    %198 = math.log %197 : vector<5x1xf32>
    %199 = arith.addf %192, %198 : vector<5x1xf32>
    %200 = tpu.iota {dimensions = array<i32: 1>} : vector<5x7xi32>
    %c0_137 = arith.constant 0 : index
    %c0_138 = arith.constant 0 : index
    %201 = vector.load %arg2[%c0_137, %c0_138] : memref<5x1xi32, #tpu.memory_space<vmem>>, vector<5x1xi32>
    %202 = vector.broadcast %201 : vector<5x1xi32> to vector<5x7xi32>
    %203 = arith.cmpi eq, %200, %202 : vector<5x7xi32>
    %cst_139 = arith.constant 1.000000e+00 : f32
    %cst_140 = arith.constant 0.000000e+00 : f32
    %204 = vector.broadcast %cst_139 : f32 to vector<5x7xf32>
    %205 = vector.broadcast %cst_140 : f32 to vector<5x7xf32>
    %206 = arith.select %203, %204, %205 : vector<5x7xi1>, vector<5x7xf32>
    %207 = arith.mulf %190, %206 : vector<5x7xf32>
    %cst_141 = arith.constant dense<0.000000e+00> : vector<5xf32>
    %208 = vector.multi_reduction <add>, %207, %cst_141 [1] : vector<5x7xf32> to vector<5xf32>
    %209 = vector.shape_cast %208 : vector<5xf32> to vector<5x1xf32>
    %210 = arith.subf %199, %209 : vector<5x1xf32>
    %211 = vector.shape_cast %210 : vector<5x1xf32> to vector<1x5x1xf32>
    %cst_142 = arith.constant dense<0.000000e+00> : vector<1xf32>
    %212 = vector.multi_reduction <add>, %211, %cst_142 [1, 2] : vector<1x5x1xf32> to vector<1xf32>
    %213 = vector.shape_cast %212 : vector<1xf32> to vector<1x1x1xf32>
    %214 = vector.extract %213[0, 0, 0] : f32 from vector<1x1x1xf32>
    %cst_143 = arith.constant 5.000000e+00 : f32
    %215 = arith.divf %214, %cst_143 : f32
    %cst_144 = arith.constant 1.000000e+00 : f32
    %216 = vector.broadcast %cst_144 : f32 to vector<1x1xf32>
    %217 = vector.broadcast %215 : f32 to vector<1x1xf32>
    %218 = arith.mulf %217, %216 : vector<1x1xf32>
    %c0_145 = arith.constant 0 : index
    %c0_146 = arith.constant 0 : index
    %219 = vector.load %arg17[%c0_145, %c0_146] : memref<1x1xf32, #tpu.memory_space<vmem>>, vector<1x1xf32>
    tpu.vector_store %arg17[%c0_145, %c0_146], %218 {strides = array<i32>} : memref<1x1xf32, #tpu.memory_space<vmem>>, vector<1x1xf32>,
    return
  }
  func.func @transform_0(%arg0: i32, %arg1: memref<5xi32, #tpu.memory_space<smem>>) -> (i32, i32) {
    %c0_i32 = arith.constant 0 : i32
    %c0_i32_0 = arith.constant 0 : i32
    %c0_i32_1 = arith.constant 0 : i32
    return %c0_i32, %c0_i32_0 : i32, i32
  }
  func.func @transform_1(%arg0: i32, %arg1: memref<5xi32, #tpu.memory_space<smem>>) -> (i32, i32, i32) {
    %c0_i32 = arith.constant 0 : i32
    %c0_i32_0 = arith.constant 0 : i32
    %c0_i32_1 = arith.constant 0 : i32
    %c0_i32_2 = arith.constant 0 : i32
    return %c0_i32, %c0_i32_0, %c0_i32_1 : i32, i32, i32
  }
  func.func @transform_2(%arg0: i32, %arg1: memref<5xi32, #tpu.memory_space<smem>>) -> (i32, i32, i32) {
    %c0_i32 = arith.constant 0 : i32
    %c0_i32_0 = arith.constant 0 : i32
    %c0_i32_1 = arith.constant 0 : i32
    %c0_i32_2 = arith.constant 0 : i32
    return %c0_i32, %c0_i32_0, %c0_i32_1 : i32, i32, i32
  }
  func.func @transform_3(%arg0: i32, %arg1: memref<5xi32, #tpu.memory_space<smem>>) -> (i32, i32, i32) {
    %c0_i32 = arith.constant 0 : i32
    %c0_i32_0 = arith.constant 0 : i32
    %c0_i32_1 = arith.constant 0 : i32
    %c0_i32_2 = arith.constant 0 : i32
    return %c0_i32, %c0_i32_0, %c0_i32_1 : i32, i32, i32
  }
  func.func @transform_4(%arg0: i32, %arg1: memref<5xi32, #tpu.memory_space<smem>>) -> (i32, i32) {
    %c0_i32 = arith.constant 0 : i32
    %c0_i32_0 = arith.constant 0 : i32
    %c0_i32_1 = arith.constant 0 : i32
    return %c0_i32, %c0_i32_0 : i32, i32
  }
  func.func @transform_5(%arg0: i32, %arg1: memref<5xi32, #tpu.memory_space<smem>>) -> (i32, i32) {
    %c0_i32 = arith.constant 0 : i32
    %c0_i32_0 = arith.constant 0 : i32
    %c0_i32_1 = arith.constant 0 : i32
    return %c0_i32, %c0_i32_0 : i32, i32
  }
  func.func @transform_6(%arg0: i32, %arg1: memref<5xi32, #tpu.memory_space<smem>>) -> (i32, i32) {
    %c0_i32 = arith.constant 0 : i32
    %c0_i32_0 = arith.constant 0 : i32
    %c0_i32_1 = arith.constant 0 : i32
    return %c0_i32, %c0_i32_0 : i32, i32
  }
  func.func @transform_7(%arg0: i32, %arg1: memref<5xi32, #tpu.memory_space<smem>>) -> (i32, i32) {
    %c0_i32 = arith.constant 0 : i32
    %c0_i32_0 = arith.constant 0 : i32
    %c0_i32_1 = arith.constant 0 : i32
    return %c0_i32, %c0_i32_0 : i32, i32
  }
  func.func @transform_8(%arg0: i32, %arg1: memref<5xi32, #tpu.memory_space<smem>>) -> (i32, i32) {
    %c0_i32 = arith.constant 0 : i32
    %c0_i32_0 = arith.constant 0 : i32
    %c0_i32_1 = arith.constant 0 : i32
    return %c0_i32, %c0_i32_0 : i32, i32
  }
  func.func @transform_9(%arg0: i32, %arg1: memref<5xi32, #tpu.memory_space<smem>>) -> (i32, i32) {
    %c0_i32 = arith.constant 0 : i32
    %c0_i32_0 = arith.constant 0 : i32
    %c0_i32_1 = arith.constant 0 : i32
    return %c0_i32, %c0_i32_0 : i32, i32
  }
  func.func @transform_10(%arg0: i32, %arg1: memref<5xi32, #tpu.memory_space<smem>>) -> (i32, i32) {
    %c0_i32 = arith.constant 0 : i32
    %c0_i32_0 = arith.constant 0 : i32
    %c0_i32_1 = arith.constant 0 : i32
    return %c0_i32, %c0_i32_0 : i32, i32
  }
  func.func @transform_11(%arg0: i32, %arg1: memref<5xi32, #tpu.memory_space<smem>>) -> (i32, i32) {
    %c0_i32 = arith.constant 0 : i32
    %c0_i32_0 = arith.constant 0 : i32
    %c0_i32_1 = arith.constant 0 : i32
    return %c0_i32, %c0_i32_0 : i32, i32
  }
  func.func @transform_12(%arg0: i32, %arg1: memref<5xi32, #tpu.memory_space<smem>>) -> (i32, i32) {
    %c0_i32 = arith.constant 0 : i32
    %c0_i32_0 = arith.constant 0 : i32
    %c0_i32_1 = arith.constant 0 : i32
    return %c0_i32, %c0_i32_0 : i32, i32
  }
  func.func @transform_13(%arg0: i32, %arg1: memref<5xi32, #tpu.memory_space<smem>>) -> (i32, i32) {
    %c0_i32 = arith.constant 0 : i32
    %c0_i32_0 = arith.constant 0 : i32
    %c0_i32_1 = arith.constant 0 : i32
    return %c0_i32, %c0_i32_0 : i32, i32
  }
  func.func @transform_14(%arg0: i32, %arg1: memref<5xi32, #tpu.memory_space<smem>>) -> (i32, i32) {
    %c0_i32 = arith.constant 0 : i32
    %c0_i32_0 = arith.constant 0 : i32
    %c0_i32_1 = arith.constant 0 : i32
    return %c0_i32, %c0_i32_0 : i32, i32
  }
  func.func @transform_15(%arg0: i32, %arg1: memref<5xi32, #tpu.memory_space<smem>>) -> (i32, i32) {
    %c0_i32 = arith.constant 0 : i32
    %c0_i32_0 = arith.constant 0 : i32
    %c0_i32_1 = arith.constant 0 : i32
    return %c0_i32, %c0_i32_0 : i32, i32
  }
}

</mosaic_0001>

<llo_original>
// kernel: tile.17
$region0: #{tile.17}
  %s0 = inlined_call_operand.vmem [shape: f32[9,8,8], index: 0, kind: input, shape index: {}]
  %s1 = inlined_call_operand.vmem [shape: f32[72,8], index: 1, kind: output, shape index: {}]
  %s2 = smov 3
  %v3 = vld [vmem:[%s0] ss:$16 sm:%s2]
  %s4 = smov 12
  %v5 = vld [vmem:[%s0] ss:$16 sm:%s4]
  %vm6 = vcmask 1043458
  %v7 = vsel %vm6, %v5, %v3
  %s8 = smov 48
  %v9 = vld [vmem:[%s0] ss:$16 sm:%s8]
  %vm10 = vcmask 1045508
  %v11 = vsel %vm10, %v9, %v7
  %s12 = smov 192
  %v13 = vld [vmem:[%s0] ss:$16 sm:%s12]
  %vm14 = vcmask 1047558
  %v15 = vsel %vm14, %v13, %v11
  %vm16 = vcmask 64512
  %17 = vst.msk [vmem:[%s1] sm:$0xff] %vm16, %v15
  %s18 = scalar_lea.vmem %s0, 8
  %s19 = smov 3
  %v20 = vld [vmem:[%s18] ss:$16 sm:%s19]
  %s21 = scalar_lea.vmem %s0, 8
  %s22 = smov 12
  %v23 = vld [vmem:[%s21] ss:$16 sm:%s22]
  %vm24 = vcmask 1043458
  %v25 = vsel %vm24, %v23, %v20
  %s26 = scalar_lea.vmem %s0, 8
  %s27 = smov 48
  %v28 = vld [vmem:[%s26] ss:$16 sm:%s27]
  %vm29 = vcmask 1045508
  %v30 = vsel %vm29, %v28, %v25
  %s31 = scalar_lea.vmem %s0, 8
  %s32 = smov 192
  %v33 = vld [vmem:[%s31] ss:$16 sm:%s32]
  %vm34 = vcmask 1047558
  %v35 = vsel %vm34, %v33, %v30
  %36 = vrot.lane.b32.xlu0 %v35, 64
  %v37 = vpop.permute.xlu0 %36
  %vm38 = vcmask 589312
  %39 = vst.msk [vmem:[%s1] sm:$0xff] %vm38, %v37
  %s40 = scalar_lea.vmem %s0, 7
  %s41 = smov 3
  %v42 = vld [vmem:[%s40] ss:$16 sm:%s41]
  %s43 = scalar_lea.vmem %s0, 7
  %s44 = smov 12
  %v45 = vld [vmem:[%s43] ss:$16 sm:%s44]
  %vm46 = vcmask 1043458
  %v47 = vsel %vm46, %v45, %v42
  %s48 = scalar_lea.vmem %s0, 7
  %s49 = smov 48
  %v50 = vld [vmem:[%s48] ss:$16 sm:%s49]
  %vm51 = vcmask 1045508
  %v52 = vsel %vm51, %v50, %v47
  %s53 = scalar_lea.vmem %s0, 7
  %s54 = smov 192
  %v55 = vld [vmem:[%s53] ss:$16 sm:%s54]
  %vm56 = vcmask 1047558
  %v57 = vsel %vm56, %v55, %v52
  %58 = vrot.lane.b32.xlu0 %v57, 56
  %v59 = vpop.permute.xlu0 %58
  %vm60 = vcmask 523712
  %61 = vst.msk [vmem:[%s1] sm:$0xff] %vm60, %v59
  %s62 = scalar_lea.vmem %s0, 6
  %s63 = smov 3
  %v64 = vld [vmem:[%s62] ss:$16 sm:%s63]
  %s65 = scalar_lea.vmem %s0, 6
  %s66 = smov 12
  %v67 = vld [vmem:[%s65] ss:$16 sm:%s66]
  %vm68 = vcmask 1043458
  %v69 = vsel %vm68, %v67, %v64
  %s70 = scalar_lea.vmem %s0, 6
  %s71 = smov 48
  %v72 = vld [vmem:[%s70] ss:$16 sm:%s71]
  %vm73 = vcmask 1045508
  %v74 = vsel %vm73, %v72, %v69
  %s75 = scalar_lea.vmem %s0, 6
  %s76 = smov 192
  %v77 = vld [vmem:[%s75] ss:$16 sm:%s76]
  %vm78 = vcmask 1047558
  %v79 = vsel %vm78, %v77, %v74
  %80 = vrot.lane.b32.xlu0 %v79, 48
  %v81 = vpop.permute.xlu0 %80
  %vm82 = vcmask 458112
  %83 = vst.msk [vmem:[%s1] sm:$0xff] %vm82, %v81
  %s84 = scalar_lea.vmem %s0, 5
  %s85 = smov 3
  %v86 = vld [vmem:[%s84] ss:$16 sm:%s85]
  %s87 = scalar_lea.vmem %s0, 5
  %s88 = smov 12
  %v89 = vld [vmem:[%s87] ss:$16 sm:%s88]
  %vm90 = vcmask 1043458
  %v91 = vsel %vm90, %v89, %v86
  %s92 = scalar_lea.vmem %s0, 5
  %s93 = smov 48
  %v94 = vld [vmem:[%s92] ss:$16 sm:%s93]
  %vm95 = vcmask 1045508
  %v96 = vsel %vm95, %v94, %v91
  %s97 = scalar_lea.vmem %s0, 5
  %s98 = smov 192
  %v99 = vld [vmem:[%s97] ss:$16 sm:%s98]
  %vm100 = vcmask 1047558
  %v101 = vsel %vm100, %v99, %v96
  %102 = vrot.lane.b32.xlu0 %v101, 40
  %v103 = vpop.permute.xlu0 %102
  %vm104 = vcmask 392512
  %105 = vst.msk [vmem:[%s1] sm:$0xff] %vm104, %v103
  %s106 = scalar_lea.vmem %s0, 4
  %s107 = smov 3
  %v108 = vld [vmem:[%s106] ss:$16 sm:%s107]
  %s109 = scalar_lea.vmem %s0, 4
  %s110 = smov 12
  %v111 = vld [vmem:[%s109] ss:$16 sm:%s110]
  %vm112 = vcmask 1043458
  %v113 = vsel %vm112, %v111, %v108
  %s114 = scalar_lea.vmem %s0, 4
  %s115 = smov 48
  %v116 = vld [vmem:[%s114] ss:$16 sm:%s115]
  %vm117 = vcmask 1045508
  %v118 = vsel %vm117, %v116, %v113
  %s119 = scalar_lea.vmem %s0, 4
  %s120 = smov 192
  %v121 = vld [vmem:[%s119] ss:$16 sm:%s120]
  %vm122 = vcmask 1047558
  %v123 = vsel %vm122, %v121, %v118
  %124 = vrot.lane.b32.xlu0 %v123, 32
  %v125 = vpop.permute.xlu0 %124
  %vm126 = vcmask 326912
  %127 = vst.msk [vmem:[%s1] sm:$0xff] %vm126, %v125
  %s128 = scalar_lea.vmem %s0, 3
  %s129 = smov 3
  %v130 = vld [vmem:[%s128] ss:$16 sm:%s129]
  %s131 = scalar_lea.vmem %s0, 3
  %s132 = smov 12
  %v133 = vld [vmem:[%s131] ss:$16 sm:%s132]
  %vm134 = vcmask 1043458
  %v135 = vsel %vm134, %v133, %v130
  %s136 = scalar_lea.vmem %s0, 3
  %s137 = smov 48
  %v138 = vld [vmem:[%s136] ss:$16 sm:%s137]
  %vm139 = vcmask 1045508
  %v140 = vsel %vm139, %v138, %v135
  %s141 = scalar_lea.vmem %s0, 3
  %s142 = smov 192
  %v143 = vld [vmem:[%s141] ss:$16 sm:%s142]
  %vm144 = vcmask 1047558
  %v145 = vsel %vm144, %v143, %v140
  %146 = vrot.lane.b32.xlu0 %v145, 24
  %v147 = vpop.permute.xlu0 %146
  %vm148 = vcmask 261312
  %149 = vst.msk [vmem:[%s1] sm:$0xff] %vm148, %v147
  %s150 = scalar_lea.vmem %s0, 2
  %s151 = smov 3
  %v152 = vld [vmem:[%s150] ss:$16 sm:%s151]
  %s153 = scalar_lea.vmem %s0, 2
  %s154 = smov 12
  %v155 = vld [vmem:[%s153] ss:$16 sm:%s154]
  %vm156 = vcmask 1043458
  %v157 = vsel %vm156, %v155, %v152
  %s158 = scalar_lea.vmem %s0, 2
  %s159 = smov 48
  %v160 = vld [vmem:[%s158] ss:$16 sm:%s159]
  %vm161 = vcmask 1045508
  %v162 = vsel %vm161, %v160, %v157
  %s163 = scalar_lea.vmem %s0, 2
  %s164 = smov 192
  %v165 = vld [vmem:[%s163] ss:$16 sm:%s164]
  %vm166 = vcmask 1047558
  %v167 = vsel %vm166, %v165, %v162
  %168 = vrot.lane.b32.xlu0 %v167, 16
  %v169 = vpop.permute.xlu0 %168
  %vm170 = vcmask 195712
  %171 = vst.msk [vmem:[%s1] sm:$0xff] %vm170, %v169
  %s172 = scalar_lea.vmem %s0, 1
  %s173 = smov 3
  %v174 = vld [vmem:[%s172] ss:$16 sm:%s173]
  %s175 = scalar_lea.vmem %s0, 1
  %s176 = smov 12
  %v177 = vld [vmem:[%s175] ss:$16 sm:%s176]
  %vm178 = vcmask 1043458
  %v179 = vsel %vm178, %v177, %v174
  %s180 = scalar_lea.vmem %s0, 1
  %s181 = smov 48
  %v182 = vld [vmem:[%s180] ss:$16 sm:%s181]
  %vm183 = vcmask 1045508
  %v184 = vsel %vm183, %v182, %v179
  %s185 = scalar_lea.vmem %s0, 1
  %s186 = smov 192
  %v187 = vld [vmem:[%s185] ss:$16 sm:%s186]
  %vm188 = vcmask 1047558
  %v189 = vsel %vm188, %v187, %v184
  %190 = vrot.lane.b32.xlu0 %v189, 8
  %v191 = vpop.permute.xlu0 %190
  %vm192 = vcmask 130112
  %193 = vst.msk [vmem:[%s1] sm:$0xff] %vm192, %v191

// kernel: obj_crop_discriminator_forward.1
$region0: #{obj_crop_discriminator_forward.1}
  #allocation0 [shape = 'u32[]', space=smem, size = 0x4, offset = 0x4, fixed_abs, tag = 'smem constant byte address 0x4 - core index']
  #allocation1 [shape = 'u32[72,128]{1,0:T(1,128)}', space=vmem, size = 0x9000, scoped, tag = 'internal scratch']
  #allocation2 [shape = 'f32[5,24,8]{2,1,0:T(8,128)}', space=vmem, size = 0xf000, scoped, tag = 'scratch operand']
  #allocation3 [shape = 'f32[5,192]{1,0:T(8,128)}', space=vmem, size = 0x2000, scoped, tag = 'scratch operand']
  #allocation4 [shape = 's32[1]{0}', space=sflag, size = 0x4, scoped, tag = 'scoped memory for obj_crop_discriminator_forward.1']
  #allocation5 [shape = 'u8[512]{0}', space=smem, size = 0x200, scoped, tag = 'prefetched SMEM operand 0']
  %s0 = inlined_call_operand.vmem [shape: s32[5], index: 0, kind: input, shape index: {}]
  %s1 = inlined_call_operand.vmem [shape: s32[5,1], index: 1, kind: input, shape index: {}]
  %s2 = inlined_call_operand.vmem [shape: f32[2,48,16], index: 2, kind: input, shape index: {}]
  %s3 = inlined_call_operand.vmem [shape: f32[5,24,48], index: 3, kind: input, shape index: {}]
  %s4 = inlined_call_operand.vmem [shape: f32[5,16,8], index: 4, kind: input, shape index: {}]
  %s5 = inlined_call_operand.vmem [shape: f32[192,72], index: 5, kind: input, shape index: {}]
  %s6 = inlined_call_operand.vmem [shape: f32[1,72], index: 6, kind: input, shape index: {}]
  %s7 = inlined_call_operand.vmem [shape: f32[72,8], index: 7, kind: input, shape index: {}]
  %s8 = inlined_call_operand.vmem [shape: f32[8,72], index: 8, kind: input, shape index: {}]
  %s9 = inlined_call_operand.vmem [shape: f32[72,16], index: 9, kind: input, shape index: {}]
  %s10 = inlined_call_operand.vmem [shape: f32[1,16], index: 10, kind: input, shape index: {}]
  %s11 = inlined_call_operand.vmem [shape: f32[16,1024], index: 11, kind: input, shape index: {}]
  %s12 = inlined_call_operand.vmem [shape: f32[1,1024], index: 12, kind: input, shape index: {}]
  %s13 = inlined_call_operand.vmem [shape: f32[1024,8], index: 13, kind: input, shape index: {}]
  %s14 = inlined_call_operand.vmem [shape: f32[1,8], index: 14, kind: input, shape index: {}]
  %s15 = inlined_call_operand.vmem [shape: f32[5,1], index: 15, kind: output, shape index: {0}]
  %s16 = inlined_call_operand.hbm [shape: f32[1,1], index: 16, kind: output, shape index: {1}]
  %17 = xla_tuple %s15, %s16
  %s18 = sld [smem:[#allocation0]]
  $region74: #{obj_crop_discriminator_forward.1} parent=0
    _
  %s20 = ssub.s32 1, %s18
  %s21 = scalar_select 0, %s20, %s18
  %s23 = sshll.u32 %s0, 4
  %s24 = int_to_ptr.vmem [resolvable:$true] %s23
  %26 = dma.vmem_to_smem %s24, 16, [#allocation5], [#allocation4]
  %28 = dma.done [#allocation4], 16
  %29 = sfence
  $region1: #{obj_crop_discriminator_forward.1} parent=0
    #allocation6 [shape = 'u8[512]{0}', space=vmem, size = 0x400, scoped, tag = 'output window, operand 1, single buffered']
    #allocation7 [shape = 's32[1]{0}', space=sflag, size = 0x4, scoped, tag = 'scoped memory for obj_crop_discriminator_forward.1']
    %30 = vsyncpa [#allocation7], 0
    // Predicated region
    $region2: #{obj_crop_discriminator_forward.1} parent=1 // pred_check
      _
    $region3: #{obj_crop_discriminator_forward.1} parent=1 // pred_check_branch
      %32 = sbr.rel (0) target = $region5
    $region4: #{obj_crop_discriminator_forward.1} parent=1 // pred_region
      _
    $region5: #{obj_crop_discriminator_forward.1} parent=1 // pred_fallthru
      _
    // Predicated region
    $region6: #{obj_crop_discriminator_forward.1} parent=1 // pred_check
      _
    $region7: #{obj_crop_discriminator_forward.1} parent=1 // pred_check_branch
      %34 = sbr.rel (0) target = $region9
    $region8: #{obj_crop_discriminator_forward.1} parent=1 // pred_region
      _
    $region9: #{obj_crop_discriminator_forward.1} parent=1 // pred_fallthru
      _
    // Predicated region
    $region10: #{obj_crop_discriminator_forward.1} parent=1 // pred_check
      _
    $region11: #{obj_crop_discriminator_forward.1} parent=1 // pred_check_branch
      %36 = sbr.rel (0) target = $region13
    $region12: #{obj_crop_discriminator_forward.1} parent=1 // pred_region
      _
    $region13: #{obj_crop_discriminator_forward.1} parent=1 // pred_fallthru
      _
    // Predicated region
    $region14: #{obj_crop_discriminator_forward.1} parent=1 // pred_check
      _
    $region15: #{obj_crop_discriminator_forward.1} parent=1 // pred_check_branch
      %38 = sbr.rel (0) target = $region17
    $region16: #{obj_crop_discriminator_forward.1} parent=1 // pred_region
      _
    $region17: #{obj_crop_discriminator_forward.1} parent=1 // pred_fallthru
      _
    // Predicated region
    $region18: #{obj_crop_discriminator_forward.1} parent=1 // pred_check
      _
    $region19: #{obj_crop_discriminator_forward.1} parent=1 // pred_check_branch
      %40 = sbr.rel (0) target = $region21
    $region20: #{obj_crop_discriminator_forward.1} parent=1 // pred_region
      _
    $region21: #{obj_crop_discriminator_forward.1} parent=1 // pred_fallthru
      _
    // Predicated region
    $region22: #{obj_crop_discriminator_forward.1} parent=1 // pred_check
      _
    $region23: #{obj_crop_discriminator_forward.1} parent=1 // pred_check_branch
      %42 = sbr.rel (0) target = $region25
    $region24: #{obj_crop_discriminator_forward.1} parent=1 // pred_region
      _
    $region25: #{obj_crop_discriminator_forward.1} parent=1 // pred_fallthru
      _
    // Predicated region
    $region26: #{obj_crop_discriminator_forward.1} parent=1 // pred_check
      _
    $region27: #{obj_crop_discriminator_forward.1} parent=1 // pred_check_branch
      %44 = sbr.rel (0) target = $region29
    $region28: #{obj_crop_discriminator_forward.1} parent=1 // pred_region
      _
    $region29: #{obj_crop_discriminator_forward.1} parent=1 // pred_fallthru
      _
    // Predicated region
    $region30: #{obj_crop_discriminator_forward.1} parent=1 // pred_check
      _
    $region31: #{obj_crop_discriminator_forward.1} parent=1 // pred_check_branch
      %46 = sbr.rel (0) target = $region33
    $region32: #{obj_crop_discriminator_forward.1} parent=1 // pred_region
      _
    $region33: #{obj_crop_discriminator_forward.1} parent=1 // pred_fallthru
      _
    // Predicated region
    $region34: #{obj_crop_discriminator_forward.1} parent=1 // pred_check
      _
    $region35: #{obj_crop_discriminator_forward.1} parent=1 // pred_check_branch
      %48 = sbr.rel (0) target = $region37
    $region36: #{obj_crop_discriminator_forward.1} parent=1 // pred_region
      _
    $region37: #{obj_crop_discriminator_forward.1} parent=1 // pred_fallthru
      _
    // Predicated region
    $region38: #{obj_crop_discriminator_forward.1} parent=1 // pred_check
      _
    $region39: #{obj_crop_discriminator_forward.1} parent=1 // pred_check_branch
      %50 = sbr.rel (0) target = $region41
    $region40: #{obj_crop_discriminator_forward.1} parent=1 // pred_region
      _
    $region41: #{obj_crop_discriminator_forward.1} parent=1 // pred_fallthru
      _
    // Predicated region
    $region42: #{obj_crop_discriminator_forward.1} parent=1 // pred_check
      _
    $region43: #{obj_crop_discriminator_forward.1} parent=1 // pred_check_branch
      %52 = sbr.rel (0) target = $region45
    $region44: #{obj_crop_discriminator_forward.1} parent=1 // pred_region
      _
    $region45: #{obj_crop_discriminator_forward.1} parent=1 // pred_fallthru
      _
    // Predicated region
    $region46: #{obj_crop_discriminator_forward.1} parent=1 // pred_check
      _
    $region47: #{obj_crop_discriminator_forward.1} parent=1 // pred_check_branch
      %54 = sbr.rel (0) target = $region49
    $region48: #{obj_crop_discriminator_forward.1} parent=1 // pred_region
      _
    $region49: #{obj_crop_discriminator_forward.1} parent=1 // pred_fallthru
      _
    // Predicated region
    $region50: #{obj_crop_discriminator_forward.1} parent=1 // pred_check
      _
    $region51: #{obj_crop_discriminator_forward.1} parent=1 // pred_check_branch
      %56 = sbr.rel (0) target = $region53
    $region52: #{obj_crop_discriminator_forward.1} parent=1 // pred_region
      _
    $region53: #{obj_crop_discriminator_forward.1} parent=1 // pred_fallthru
      _
    // Predicated region
    $region54: #{obj_crop_discriminator_forward.1} parent=1 // pred_check
      _
    $region55: #{obj_crop_discriminator_forward.1} parent=1 // pred_check_branch
      %58 = sbr.rel (0) target = $region57
    $region56: #{obj_crop_discriminator_forward.1} parent=1 // pred_region
      _
    $region57: #{obj_crop_discriminator_forward.1} parent=1 // pred_fallthru
      _
    %s59 = sld [smem:[#allocation5]]
    %s60 = smul.u32 %s59, 48
    %s61 = scalar_lea.vmem %s2, %s60
    %v62 = vld [vmem:[%s61] sm:$0xff]
    %v63 = vld [vmem:[%s61 + $0x8] sm:$0xff]
    %v64 = vld [vmem:[%s61 + $0x10] sm:$0xff]
    %v65 = vld [vmem:[%s61 + $0x18] sm:$0xff]
    %v66 = vld [vmem:[%s61 + $0x20] sm:$0xff]
    %v67 = vld [vmem:[%s61 + $0x28] sm:$0xff]
    %v68 = vld [vmem:[%s4] sm:$0xff]
    %v69 = vld [vmem:[%s4 + $0x8] sm:$0xff]
    %vm70 = vcmask 130048
    %v72 = vsel %vm70, %v62, 0
    %v75 = vsel %vm70, %v63, 0
    %v78 = vsel %vm70, %v64, 0
    %v81 = vsel %vm70, %v65, 0
    %v84 = vsel %vm70, %v66, 0
    %v87 = vsel %vm70, %v67, 0
    %89 = vmatpush.msra.mxu0 0.0
    %90 = vmatpush.msra.mxu0 0.0
    %91 = vmatpush.msra.mxu0 0.0
    %92 = vmatpush.msra.mxu0 0.0
    %93 = vmatpush.msra.mxu0 0.0
    %94 = vmatpush.msra.mxu0 0.0
    %95 = vmatpush.msra.mxu0 0.0
    %96 = vmatpush.msra.mxu0 0.0
    %97 = vmatpush.msra.mxu0 0.0
    %98 = vmatpush.msra.mxu0 0.0
    %99 = vmatpush.msra.mxu0 0.0
    %100 = vmatpush.msra.mxu0 0.0
    %101 = vmatpush.msra.mxu0 0.0
    %102 = vmatpush.msra.mxu0 0.0
    %103 = vmatpush.msra.mxu0 %v69
    %104 = vmatpush.msra.mxu0 %v68
    %105 = vmatmul.f32.gmra.mxu0 %v72
    %v106 = vpop.f32.mrf.mxu0
    %v107 = vadd.f32 0.0, %v106
    %108 = vmatmul.f32.gmra.mxu0 %v75
    %v109 = vpop.f32.mrf.mxu0
    %v110 = vadd.f32 0.0, %v109
    %111 = vmatmul.f32.gmra.mxu0 %v78
    %v112 = vpop.f32.mrf.mxu0
    %v113 = vadd.f32 0.0, %v112
    %114 = vmatmul.f32.gmra.mxu0 %v81
    %v115 = vpop.f32.mrf.mxu0
    %v116 = vadd.f32 0.0, %v115
    %117 = vmatmul.f32.gmra.mxu0 %v84
    %v118 = vpop.f32.mrf.mxu0
    %v119 = vadd.f32 0.0, %v118
    %120 = vmatmul.f32.gmra.mxu0 %v87
    %v121 = vpop.f32.mrf.mxu0
    %v122 = vadd.f32 0.0, %v121
    %123 = vdwg.mxu0
    %v124 = vld [vmem:[%s3] sm:$0xff]
    %v125 = vld [vmem:[%s3 + $0x8] sm:$0xff]
    %v126 = vld [vmem:[%s3 + $0x10] sm:$0xff]
    %vm127 = vcmask 392192
    %v129 = vsel %vm127, %v124, 0
    %v132 = vsel %vm127, %v125, 0
    %v135 = vsel %vm127, %v126, 0
    %137 = vmatpush.msra.mxu0 0.0
    %138 = vmatpush.msra.mxu0 0.0
    %139 = vmatpush.msra.mxu0 0.0
    %140 = vmatpush.msra.mxu0 0.0
    %141 = vmatpush.msra.mxu0 0.0
    %142 = vmatpush.msra.mxu0 0.0
    %143 = vmatpush.msra.mxu0 0.0
    %144 = vmatpush.msra.mxu0 0.0
    %145 = vmatpush.msra.mxu0 0.0
    %146 = vmatpush.msra.mxu0 0.0
    %147 = vmatpush.msra.mxu0 %v122
    %148 = vmatpush.msra.mxu0 %v119
    %149 = vmatpush.msra.mxu0 %v116
    %150 = vmatpush.msra.mxu0 %v113
    %151 = vmatpush.msra.mxu0 %v110
    %152 = vmatpush.msra.mxu0 %v107
    %153 = vmatmul.f32.gmra.mxu0 %v129
    %v154 = vpop.f32.mrf.mxu0
    %v155 = vadd.f32 0.0, %v154
    %156 = vmatmul.f32.gmra.mxu0 %v132
    %v157 = vpop.f32.mrf.mxu0
    %v158 = vadd.f32 0.0, %v157
    %159 = vmatmul.f32.gmra.mxu0 %v135
    %v160 = vpop.f32.mrf.mxu0
    %v161 = vadd.f32 0.0, %v160
    %162 = vdwg.mxu0
    %vm163 = vcmask 64512
    %164 = vst.msk [vmem:[#allocation2] sm:$0xff] %vm163, %v155
    %165 = vst.msk [vmem:[#allocation2 + $0x8] sm:$0xff] %vm163, %v158
    %166 = vst.msk [vmem:[#allocation2 + $0x10] sm:$0xff] %vm163, %v161
    %s167 = sld [smem:[#allocation5 + $0x1]]
    %s168 = smul.u32 %s167, 48
    %s169 = scalar_lea.vmem %s2, %s168
    %v170 = vld [vmem:[%s169] sm:$0xff]
    %v171 = vld [vmem:[%s169 + $0x8] sm:$0xff]
    %v172 = vld [vmem:[%s169 + $0x10] sm:$0xff]
    %v173 = vld [vmem:[%s169 + $0x18] sm:$0xff]
    %v174 = vld [vmem:[%s169 + $0x20] sm:$0xff]
    %v175 = vld [vmem:[%s169 + $0x28] sm:$0xff]
    %s176 = scalar_lea.vmem %s4, 16
    %v177 = vld [vmem:[%s176] sm:$0xff]
    %v178 = vld [vmem:[%s176 + $0x8] sm:$0xff]
    %v180 = vsel %vm70, %v170, 0
    %v183 = vsel %vm70, %v171, 0
    %v186 = vsel %vm70, %v172, 0
    %v189 = vsel %vm70, %v173, 0
    %v192 = vsel %vm70, %v174, 0
    %v195 = vsel %vm70, %v175, 0
    %197 = vmatpush.msra.mxu0 0.0
    %198 = vmatpush.msra.mxu0 0.0
    %199 = vmatpush.msra.mxu0 0.0
    %200 = vmatpush.msra.mxu0 0.0
    %201 = vmatpush.msra.mxu0 0.0
    %202 = vmatpush.msra.mxu0 0.0
    %203 = vmatpush.msra.mxu0 0.0
    %204 = vmatpush.msra.mxu0 0.0
    %205 = vmatpush.msra.mxu0 0.0
    %206 = vmatpush.msra.mxu0 0.0
    %207 = vmatpush.msra.mxu0 0.0
    %208 = vmatpush.msra.mxu0 0.0
    %209 = vmatpush.msra.mxu0 0.0
    %210 = vmatpush.msra.mxu0 0.0
    %211 = vmatpush.msra.mxu0 %v178
    %212 = vmatpush.msra.mxu0 %v177
    %213 = vmatmul.f32.gmra.mxu0 %v180
    %v214 = vpop.f32.mrf.mxu0
    %v215 = vadd.f32 0.0, %v214
    %216 = vmatmul.f32.gmra.mxu0 %v183
    %v217 = vpop.f32.mrf.mxu0
    %v218 = vadd.f32 0.0, %v217
    %219 = vmatmul.f32.gmra.mxu0 %v186
    %v220 = vpop.f32.mrf.mxu0
    %v221 = vadd.f32 0.0, %v220
    %222 = vmatmul.f32.gmra.mxu0 %v189
    %v223 = vpop.f32.mrf.mxu0
    %v224 = vadd.f32 0.0, %v223
    %225 = vmatmul.f32.gmra.mxu0 %v192
    %v226 = vpop.f32.mrf.mxu0
    %v227 = vadd.f32 0.0, %v226
    %228 = vmatmul.f32.gmra.mxu0 %v195
    %v229 = vpop.f32.mrf.mxu0
    %v230 = vadd.f32 0.0, %v229
    %231 = vdwg.mxu0
    %s232 = scalar_lea.vmem %s3, 24
    %v233 = vld [vmem:[%s232] sm:$0xff]
    %v234 = vld [vmem:[%s232 + $0x8] sm:$0xff]
    %v235 = vld [vmem:[%s232 + $0x10] sm:$0xff]
    %v237 = vsel %vm127, %v233, 0
    %v240 = vsel %vm127, %v234, 0
    %v243 = vsel %vm127, %v235, 0
    %245 = vmatpush.msra.mxu0 0.0
    %246 = vmatpush.msra.mxu0 0.0
    %247 = vmatpush.msra.mxu0 0.0
    %248 = vmatpush.msra.mxu0 0.0
    %249 = vmatpush.msra.mxu0 0.0
    %250 = vmatpush.msra.mxu0 0.0
    %251 = vmatpush.msra.mxu0 0.0
    %252 = vmatpush.msra.mxu0 0.0
    %253 = vmatpush.msra.mxu0 0.0
    %254 = vmatpush.msra.mxu0 0.0
    %255 = vmatpush.msra.mxu0 %v230
    %256 = vmatpush.msra.mxu0 %v227
    %257 = vmatpush.msra.mxu0 %v224
    %258 = vmatpush.msra.mxu0 %v221
    %259 = vmatpush.msra.mxu0 %v218
    %260 = vmatpush.msra.mxu0 %v215
    %261 = vmatmul.f32.gmra.mxu0 %v237
    %v262 = vpop.f32.mrf.mxu0
    %v263 = vadd.f32 0.0, %v262
    %264 = vmatmul.f32.gmra.mxu0 %v240
    %v265 = vpop.f32.mrf.mxu0
    %v266 = vadd.f32 0.0, %v265
    %267 = vmatmul.f32.gmra.mxu0 %v243
    %v268 = vpop.f32.mrf.mxu0
    %v269 = vadd.f32 0.0, %v268
    %270 = vdwg.mxu0
    %s271 = scalar_lea.vmem [#allocation2], 24
    %272 = vst.msk [vmem:[%s271] sm:$0xff] %vm163, %v263
    %273 = vst.msk [vmem:[%s271 + $0x8] sm:$0xff] %vm163, %v266
    %274 = vst.msk [vmem:[%s271 + $0x10] sm:$0xff] %vm163, %v269
    %s275 = sld [smem:[#allocation5 + $0x2]]
    %s276 = smul.u32 %s275, 48
    %s277 = scalar_lea.vmem %s2, %s276
    %v278 = vld [vmem:[%s277] sm:$0xff]
    %v279 = vld [vmem:[%s277 + $0x8] sm:$0xff]
    %v280 = vld [vmem:[%s277 + $0x10] sm:$0xff]
    %v281 = vld [vmem:[%s277 + $0x18] sm:$0xff]
    %v282 = vld [vmem:[%s277 + $0x20] sm:$0xff]
    %v283 = vld [vmem:[%s277 + $0x28] sm:$0xff]
    %s284 = scalar_lea.vmem %s4, 32
    %v285 = vld [vmem:[%s284] sm:$0xff]
    %v286 = vld [vmem:[%s284 + $0x8] sm:$0xff]
    %v288 = vsel %vm70, %v278, 0
    %v291 = vsel %vm70, %v279, 0
    %v294 = vsel %vm70, %v280, 0
    %v297 = vsel %vm70, %v281, 0
    %v300 = vsel %vm70, %v282, 0
    %v303 = vsel %vm70, %v283, 0
    %305 = vmatpush.msra.mxu0 0.0
    %306 = vmatpush.msra.mxu0 0.0
    %307 = vmatpush.msra.mxu0 0.0
    %308 = vmatpush.msra.mxu0 0.0
    %309 = vmatpush.msra.mxu0 0.0
    %310 = vmatpush.msra.mxu0 0.0
    %311 = vmatpush.msra.mxu0 0.0
    %312 = vmatpush.msra.mxu0 0.0
    %313 = vmatpush.msra.mxu0 0.0
    %314 = vmatpush.msra.mxu0 0.0
    %315 = vmatpush.msra.mxu0 0.0
    %316 = vmatpush.msra.mxu0 0.0
    %317 = vmatpush.msra.mxu0 0.0
    %318 = vmatpush.msra.mxu0 0.0
    %319 = vmatpush.msra.mxu0 %v286
    %320 = vmatpush.msra.mxu0 %v285
    %321 = vmatmul.f32.gmra.mxu0 %v288
    %v322 = vpop.f32.mrf.mxu0
    %v323 = vadd.f32 0.0, %v322
    %324 = vmatmul.f32.gmra.mxu0 %v291
    %v325 = vpop.f32.mrf.mxu0
    %v326 = vadd.f32 0.0, %v325
    %327 = vmatmul.f32.gmra.mxu0 %v294
    %v328 = vpop.f32.mrf.mxu0
    %v329 = vadd.f32 0.0, %v328
    %330 = vmatmul.f32.gmra.mxu0 %v297
    %v331 = vpop.f32.mrf.mxu0
    %v332 = vadd.f32 0.0, %v331
    %333 = vmatmul.f32.gmra.mxu0 %v300
    %v334 = vpop.f32.mrf.mxu0
    %v335 = vadd.f32 0.0, %v334
    %336 = vmatmul.f32.gmra.mxu0 %v303
    %v337 = vpop.f32.mrf.mxu0
    %v338 = vadd.f32 0.0, %v337
    %339 = vdwg.mxu0
    %s340 = scalar_lea.vmem %s3, 48
    %v341 = vld [vmem:[%s340] sm:$0xff]
    %v342 = vld [vmem:[%s340 + $0x8] sm:$0xff]
    %v343 = vld [vmem:[%s340 + $0x10] sm:$0xff]
    %v345 = vsel %vm127, %v341, 0
    %v348 = vsel %vm127, %v342, 0
    %v351 = vsel %vm127, %v343, 0
    %353 = vmatpush.msra.mxu0 0.0
    %354 = vmatpush.msra.mxu0 0.0
    %355 = vmatpush.msra.mxu0 0.0
    %356 = vmatpush.msra.mxu0 0.0
    %357 = vmatpush.msra.mxu0 0.0
    %358 = vmatpush.msra.mxu0 0.0
    %359 = vmatpush.msra.mxu0 0.0
    %360 = vmatpush.msra.mxu0 0.0
    %361 = vmatpush.msra.mxu0 0.0
    %362 = vmatpush.msra.mxu0 0.0
    %363 = vmatpush.msra.mxu0 %v338
    %364 = vmatpush.msra.mxu0 %v335
    %365 = vmatpush.msra.mxu0 %v332
    %366 = vmatpush.msra.mxu0 %v329
    %367 = vmatpush.msra.mxu0 %v326
    %368 = vmatpush.msra.mxu0 %v323
    %369 = vmatmul.f32.gmra.mxu0 %v345
    %v370 = vpop.f32.mrf.mxu0
    %v371 = vadd.f32 0.0, %v370
    %372 = vmatmul.f32.gmra.mxu0 %v348
    %v373 = vpop.f32.mrf.mxu0
    %v374 = vadd.f32 0.0, %v373
    %375 = vmatmul.f32.gmra.mxu0 %v351
    %v376 = vpop.f32.mrf.mxu0
    %v377 = vadd.f32 0.0, %v376
    %378 = vdwg.mxu0
    %s379 = scalar_lea.vmem [#allocation2], 48
    %380 = vst.msk [vmem:[%s379] sm:$0xff] %vm163, %v371
    %381 = vst.msk [vmem:[%s379 + $0x8] sm:$0xff] %vm163, %v374
    %382 = vst.msk [vmem:[%s379 + $0x10] sm:$0xff] %vm163, %v377
    %s383 = sld [smem:[#allocation5 + $0x3]]
    %s384 = smul.u32 %s383, 48
    %s385 = scalar_lea.vmem %s2, %s384
    %v386 = vld [vmem:[%s385] sm:$0xff]
    %v387 = vld [vmem:[%s385 + $0x8] sm:$0xff]
    %v388 = vld [vmem:[%s385 + $0x10] sm:$0xff]
    %v389 = vld [vmem:[%s385 + $0x18] sm:$0xff]
    %v390 = vld [vmem:[%s385 + $0x20] sm:$0xff]
    %v391 = vld [vmem:[%s385 + $0x28] sm:$0xff]
    %s392 = scalar_lea.vmem %s4, 48
    %v393 = vld [vmem:[%s392] sm:$0xff]
    %v394 = vld [vmem:[%s392 + $0x8] sm:$0xff]
    %v396 = vsel %vm70, %v386, 0
    %v399 = vsel %vm70, %v387, 0
    %v402 = vsel %vm70, %v388, 0
    %v405 = vsel %vm70, %v389, 0
    %v408 = vsel %vm70, %v390, 0
    %v411 = vsel %vm70, %v391, 0
    %413 = vmatpush.msra.mxu0 0.0
    %414 = vmatpush.msra.mxu0 0.0
    %415 = vmatpush.msra.mxu0 0.0
    %416 = vmatpush.msra.mxu0 0.0
    %417 = vmatpush.msra.mxu0 0.0
    %418 = vmatpush.msra.mxu0 0.0
    %419 = vmatpush.msra.mxu0 0.0
    %420 = vmatpush.msra.mxu0 0.0
    %421 = vmatpush.msra.mxu0 0.0
    %422 = vmatpush.msra.mxu0 0.0
    %423 = vmatpush.msra.mxu0 0.0
    %424 = vmatpush.msra.mxu0 0.0
    %425 = vmatpush.msra.mxu0 0.0
    %426 = vmatpush.msra.mxu0 0.0
    %427 = vmatpush.msra.mxu0 %v394
    %428 = vmatpush.msra.mxu0 %v393
    %429 = vmatmul.f32.gmra.mxu0 %v396
    %v430 = vpop.f32.mrf.mxu0
    %v431 = vadd.f32 0.0, %v430
    %432 = vmatmul.f32.gmra.mxu0 %v399
    %v433 = vpop.f32.mrf.mxu0
    %v434 = vadd.f32 0.0, %v433
    %435 = vmatmul.f32.gmra.mxu0 %v402
    %v436 = vpop.f32.mrf.mxu0
    %v437 = vadd.f32 0.0, %v436
    %438 = vmatmul.f32.gmra.mxu0 %v405
    %v439 = vpop.f32.mrf.mxu0
    %v440 = vadd.f32 0.0, %v439
    %441 = vmatmul.f32.gmra.mxu0 %v408
    %v442 = vpop.f32.mrf.mxu0
    %v443 = vadd.f32 0.0, %v442
    %444 = vmatmul.f32.gmra.mxu0 %v411
    %v445 = vpop.f32.mrf.mxu0
    %v446 = vadd.f32 0.0, %v445
    %447 = vdwg.mxu0
    %s448 = scalar_lea.vmem %s3, 72
    %v449 = vld [vmem:[%s448] sm:$0xff]
    %v450 = vld [vmem:[%s448 + $0x8] sm:$0xff]
    %v451 = vld [vmem:[%s448 + $0x10] sm:$0xff]
    %v453 = vsel %vm127, %v449, 0
    %v456 = vsel %vm127, %v450, 0
    %v459 = vsel %vm127, %v451, 0
    %461 = vmatpush.msra.mxu0 0.0
    %462 = vmatpush.msra.mxu0 0.0
    %463 = vmatpush.msra.mxu0 0.0
    %464 = vmatpush.msra.mxu0 0.0
    %465 = vmatpush.msra.mxu0 0.0
    %466 = vmatpush.msra.mxu0 0.0
    %467 = vmatpush.msra.mxu0 0.0
    %468 = vmatpush.msra.mxu0 0.0
    %469 = vmatpush.msra.mxu0 0.0
    %470 = vmatpush.msra.mxu0 0.0
    %471 = vmatpush.msra.mxu0 %v446
    %472 = vmatpush.msra.mxu0 %v443
    %473 = vmatpush.msra.mxu0 %v440
    %474 = vmatpush.msra.mxu0 %v437
    %475 = vmatpush.msra.mxu0 %v434
    %476 = vmatpush.msra.mxu0 %v431
    %477 = vmatmul.f32.gmra.mxu0 %v453
    %v478 = vpop.f32.mrf.mxu0
    %v479 = vadd.f32 0.0, %v478
    %480 = vmatmul.f32.gmra.mxu0 %v456
    %v481 = vpop.f32.mrf.mxu0
    %v482 = vadd.f32 0.0, %v481
    %483 = vmatmul.f32.gmra.mxu0 %v459
    %v484 = vpop.f32.mrf.mxu0
    %v485 = vadd.f32 0.0, %v484
    %486 = vdwg.mxu0
    %s487 = scalar_lea.vmem [#allocation2], 72
    %488 = vst.msk [vmem:[%s487] sm:$0xff] %vm163, %v479
    %489 = vst.msk [vmem:[%s487 + $0x8] sm:$0xff] %vm163, %v482
    %490 = vst.msk [vmem:[%s487 + $0x10] sm:$0xff] %vm163, %v485
    %s491 = sld [smem:[#allocation5 + $0x4]]
    %s492 = smul.u32 %s491, 48
    %s493 = scalar_lea.vmem %s2, %s492
    %v494 = vld [vmem:[%s493] sm:$0xff]
    %v495 = vld [vmem:[%s493 + $0x8] sm:$0xff]
    %v496 = vld [vmem:[%s493 + $0x10] sm:$0xff]
    %v497 = vld [vmem:[%s493 + $0x18] sm:$0xff]
    %v498 = vld [vmem:[%s493 + $0x20] sm:$0xff]
    %v499 = vld [vmem:[%s493 + $0x28] sm:$0xff]
    %s500 = scalar_lea.vmem %s4, 64
    %v501 = vld [vmem:[%s500] sm:$0xff]
    %v502 = vld [vmem:[%s500 + $0x8] sm:$0xff]
    %v504 = vsel %vm70, %v494, 0
    %v507 = vsel %vm70, %v495, 0
    %v510 = vsel %vm70, %v496, 0
    %v513 = vsel %vm70, %v497, 0
    %v516 = vsel %vm70, %v498, 0
    %v519 = vsel %vm70, %v499, 0
    %521 = vmatpush.msra.mxu0 0.0
    %522 = vmatpush.msra.mxu0 0.0
    %523 = vmatpush.msra.mxu0 0.0
    %524 = vmatpush.msra.mxu0 0.0
    %525 = vmatpush.msra.mxu0 0.0
    %526 = vmatpush.msra.mxu0 0.0
    %527 = vmatpush.msra.mxu0 0.0
    %528 = vmatpush.msra.mxu0 0.0
    %529 = vmatpush.msra.mxu0 0.0
    %530 = vmatpush.msra.mxu0 0.0
    %531 = vmatpush.msra.mxu0 0.0
    %532 = vmatpush.msra.mxu0 0.0
    %533 = vmatpush.msra.mxu0 0.0
    %534 = vmatpush.msra.mxu0 0.0
    %535 = vmatpush.msra.mxu0 %v502
    %536 = vmatpush.msra.mxu0 %v501
    %537 = vmatmul.f32.gmra.mxu0 %v504
    %v538 = vpop.f32.mrf.mxu0
    %v539 = vadd.f32 0.0, %v538
    %540 = vmatmul.f32.gmra.mxu0 %v507
    %v541 = vpop.f32.mrf.mxu0
    %v542 = vadd.f32 0.0, %v541
    %543 = vmatmul.f32.gmra.mxu0 %v510
    %v544 = vpop.f32.mrf.mxu0
    %v545 = vadd.f32 0.0, %v544
    %546 = vmatmul.f32.gmra.mxu0 %v513
    %v547 = vpop.f32.mrf.mxu0
    %v548 = vadd.f32 0.0, %v547
    %549 = vmatmul.f32.gmra.mxu0 %v516
    %v550 = vpop.f32.mrf.mxu0
    %v551 = vadd.f32 0.0, %v550
    %552 = vmatmul.f32.gmra.mxu0 %v519
    %v553 = vpop.f32.mrf.mxu0
    %v554 = vadd.f32 0.0, %v553
    %555 = vdwg.mxu0
    %s556 = scalar_lea.vmem %s3, 96
    %v557 = vld [vmem:[%s556] sm:$0xff]
    %v558 = vld [vmem:[%s556 + $0x8] sm:$0xff]
    %v559 = vld [vmem:[%s556 + $0x10] sm:$0xff]
    %v561 = vsel %vm127, %v557, 0
    %v564 = vsel %vm127, %v558, 0
    %v567 = vsel %vm127, %v559, 0
    %569 = vmatpush.msra.mxu0 0.0
    %570 = vmatpush.msra.mxu0 0.0
    %571 = vmatpush.msra.mxu0 0.0
    %572 = vmatpush.msra.mxu0 0.0
    %573 = vmatpush.msra.mxu0 0.0
    %574 = vmatpush.msra.mxu0 0.0
    %575 = vmatpush.msra.mxu0 0.0
    %576 = vmatpush.msra.mxu0 0.0
    %577 = vmatpush.msra.mxu0 0.0
    %578 = vmatpush.msra.mxu0 0.0
    %579 = vmatpush.msra.mxu0 %v554
    %580 = vmatpush.msra.mxu0 %v551
    %581 = vmatpush.msra.mxu0 %v548
    %582 = vmatpush.msra.mxu0 %v545
    %583 = vmatpush.msra.mxu0 %v542
    %584 = vmatpush.msra.mxu0 %v539
    %585 = vmatmul.f32.gmra.mxu0 %v561
    %v586 = vpop.f32.mrf.mxu0
    %v587 = vadd.f32 0.0, %v586
    %588 = vmatmul.f32.gmra.mxu0 %v564
    %v589 = vpop.f32.mrf.mxu0
    %v590 = vadd.f32 0.0, %v589
    %591 = vmatmul.f32.gmra.mxu0 %v567
    %v592 = vpop.f32.mrf.mxu0
    %v593 = vadd.f32 0.0, %v592
    %594 = vdwg.mxu0
    %s595 = scalar_lea.vmem [#allocation2], 96
    %596 = vst.msk [vmem:[%s595] sm:$0xff] %vm163, %v587
    %597 = vst.msk [vmem:[%s595 + $0x8] sm:$0xff] %vm163, %v590
    %598 = vst.msk [vmem:[%s595 + $0x10] sm:$0xff] %vm163, %v593
    %v599 = vld [vmem:[#allocation2] sm:$0xff]
    %v600 = vld [vmem:[#allocation2 + $0x8] sm:$0xff]
    %v601 = vld [vmem:[#allocation2 + $0x10] sm:$0xff]
    %v602 = vld [vmem:[#allocation2 + $0x18] sm:$0xff]
    %v603 = vld [vmem:[#allocation2 + $0x20] sm:$0xff]
    %v604 = vld [vmem:[#allocation2 + $0x28] sm:$0xff]
    %v605 = vld [vmem:[#allocation2 + $0x30] sm:$0xff]
    %v606 = vld [vmem:[#allocation2 + $0x38] sm:$0xff]
    %v607 = vld [vmem:[#allocation2 + $0x40] sm:$0xff]
    %v608 = vld [vmem:[#allocation2 + $0x48] sm:$0xff]
    %v609 = vld [vmem:[#allocation2 + $0x50] sm:$0xff]
    %v610 = vld [vmem:[#allocation2 + $0x58] sm:$0xff]
    %v611 = vld [vmem:[#allocation2 + $0x60] sm:$0xff]
    %v612 = vld [vmem:[#allocation2 + $0x68] sm:$0xff]
    %v613 = vld [vmem:[#allocation2 + $0x70] sm:$0xff]
    %v619 = vrot.slane %v602, 7
    %vm620 = vcmask 1041409
    %v621 = vsel %vm620, %v619, %v599
    %v622 = vrot.slane %v605, 6
    %vm623 = vcmask 1042434
    %v624 = vsel %vm623, %v622, %v621
    %v625 = vrot.slane %v608, 5
    %vm626 = vcmask 1043459
    %v627 = vsel %vm626, %v625, %v624
    %v628 = vrot.slane %v611, 4
    %vm629 = vcmask 1044484
    %v630 = vsel %vm629, %v628, %v627
    %vm632 = vcmask 61440
    %633 = vst.msk [vmem:[#allocation3] sm:$0x1f] %vm632, %v630
    %v634 = vrot.slane %v599, 1
    %v635 = vsel %vm620, %v602, %v634
    %v636 = vrot.slane %v605, 7
    %v637 = vsel %vm623, %v636, %v635
    %v638 = vrot.slane %v608, 6
    %v639 = vsel %vm626, %v638, %v637
    %v640 = vrot.slane %v611, 5
    %v641 = vsel %vm629, %v640, %v639
    %642 = vrot.lane.b32.xlu0 %v641, 8
    %v643 = vpop.permute.xlu0 %642
    %vm645 = vcmask 127040
    %646 = vst.msk [vmem:[#allocation3] sm:$0x1f] %vm645, %v643
    %v647 = vrot.slane %v599, 2
    %v648 = vrot.slane %v602, 1
    %v649 = vsel %vm620, %v648, %v647
    %v650 = vsel %vm623, %v605, %v649
    %v651 = vrot.slane %v608, 7
    %v652 = vsel %vm626, %v651, %v650
    %v653 = vrot.slane %v611, 6
    %v654 = vsel %vm629, %v653, %v652
    %655 = vrot.lane.b32.xlu0 %v654, 16
    %v656 = vpop.permute.xlu0 %655
    %vm658 = vcmask 192640
    %659 = vst.msk [vmem:[#allocation3] sm:$0x1f] %vm658, %v656
    %v660 = vrot.slane %v599, 3
    %v661 = vrot.slane %v602, 2
    %v662 = vsel %vm620, %v661, %v660
    %v663 = vrot.slane %v605, 1
    %v664 = vsel %vm623, %v663, %v662
    %v665 = vsel %vm626, %v608, %v664
    %v666 = vrot.slane %v611, 7
    %v667 = vsel %vm629, %v666, %v665
    %668 = vrot.lane.b32.xlu0 %v667, 24
    %v669 = vpop.permute.xlu0 %668
    %vm671 = vcmask 258240
    %672 = vst.msk [vmem:[#allocation3] sm:$0x1f] %vm671, %v669
    %v673 = vrot.slane %v599, 4
    %v674 = vrot.slane %v602, 3
    %v675 = vsel %vm620, %v674, %v673
    %v676 = vrot.slane %v605, 2
    %v677 = vsel %vm623, %v676, %v675
    %v678 = vrot.slane %v608, 1
    %v679 = vsel %vm626, %v678, %v677
    %v680 = vsel %vm629, %v611, %v679
    %681 = vrot.lane.b32.xlu0 %v680, 32
    %v682 = vpop.permute.xlu0 %681
    %vm684 = vcmask 323840
    %685 = vst.msk [vmem:[#allocation3] sm:$0x1f] %vm684, %v682
    %v686 = vrot.slane %v599, 5
    %v687 = vrot.slane %v602, 4
    %v688 = vsel %vm620, %v687, %v686
    %v689 = vrot.slane %v605, 3
    %v690 = vsel %vm623, %v689, %v688
    %v691 = vrot.slane %v608, 2
    %v692 = vsel %vm626, %v691, %v690
    %v693 = vrot.slane %v611, 1
    %v694 = vsel %vm629, %v693, %v692
    %695 = vrot.lane.b32.xlu0 %v694, 40
    %v696 = vpop.permute.xlu0 %695
    %vm698 = vcmask 389440
    %699 = vst.msk [vmem:[#allocation3] sm:$0x1f] %vm698, %v696
    %v700 = vrot.slane %v599, 6
    %v701 = vrot.slane %v602, 5
    %v702 = vsel %vm620, %v701, %v700
    %v703 = vrot.slane %v605, 4
    %v704 = vsel %vm623, %v703, %v702
    %v705 = vrot.slane %v608, 3
    %v706 = vsel %vm626, %v705, %v704
    %v707 = vrot.slane %v611, 2
    %v708 = vsel %vm629, %v707, %v706
    %709 = vrot.lane.b32.xlu0 %v708, 48
    %v710 = vpop.permute.xlu0 %709
    %vm712 = vcmask 455040
    %713 = vst.msk [vmem:[#allocation3] sm:$0x1f] %vm712, %v710
    %v714 = vrot.slane %v599, 7
    %v715 = vrot.slane %v602, 6
    %v716 = vsel %vm620, %v715, %v714
    %v717 = vrot.slane %v605, 5
    %v718 = vsel %vm623, %v717, %v716
    %v719 = vrot.slane %v608, 4
    %v720 = vsel %vm626, %v719, %v718
    %v721 = vrot.slane %v611, 3
    %v722 = vsel %vm629, %v721, %v720
    %723 = vrot.lane.b32.xlu0 %v722, 56
    %v724 = vpop.permute.xlu0 %723
    %vm726 = vcmask 520640
    %727 = vst.msk [vmem:[#allocation3] sm:$0x1f] %vm726, %v724
    %v733 = vrot.slane %v603, 7
    %v734 = vsel %vm620, %v733, %v600
    %v735 = vrot.slane %v606, 6
    %v736 = vsel %vm623, %v735, %v734
    %v737 = vrot.slane %v609, 5
    %v738 = vsel %vm626, %v737, %v736
    %v739 = vrot.slane %v612, 4
    %v740 = vsel %vm629, %v739, %v738
    %741 = vrot.lane.b32.xlu0 %v740, 64
    %v742 = vpop.permute.xlu0 %741
    %vm744 = vcmask 586240
    %745 = vst.msk [vmem:[#allocation3] sm:$0x1f] %vm744, %v742
    %v746 = vrot.slane %v600, 1
    %v747 = vsel %vm620, %v603, %v746
    %v748 = vrot.slane %v606, 7
    %v749 = vsel %vm623, %v748, %v747
    %v750 = vrot.slane %v609, 6
    %v751 = vsel %vm626, %v750, %v749
    %v752 = vrot.slane %v612, 5
    %v753 = vsel %vm629, %v752, %v751
    %754 = vrot.lane.b32.xlu0 %v753, 72
    %v755 = vpop.permute.xlu0 %754
    %vm757 = vcmask 651840
    %758 = vst.msk [vmem:[#allocation3] sm:$0x1f] %vm757, %v755
    %v759 = vrot.slane %v600, 2
    %v760 = vrot.slane %v603, 1
    %v761 = vsel %vm620, %v760, %v759
    %v762 = vsel %vm623, %v606, %v761
    %v763 = vrot.slane %v609, 7
    %v764 = vsel %vm626, %v763, %v762
    %v765 = vrot.slane %v612, 6
    %v766 = vsel %vm629, %v765, %v764
    %767 = vrot.lane.b32.xlu0 %v766, 80
    %v768 = vpop.permute.xlu0 %767
    %vm770 = vcmask 717440
    %771 = vst.msk [vmem:[#allocation3] sm:$0x1f] %vm770, %v768
    %v772 = vrot.slane %v600, 3
    %v773 = vrot.slane %v603, 2
    %v774 = vsel %vm620, %v773, %v772
    %v775 = vrot.slane %v606, 1
    %v776 = vsel %vm623, %v775, %v774
    %v777 = vsel %vm626, %v609, %v776
    %v778 = vrot.slane %v612, 7
    %v779 = vsel %vm629, %v778, %v777
    %780 = vrot.lane.b32.xlu0 %v779, 88
    %v781 = vpop.permute.xlu0 %780
    %vm783 = vcmask 783040
    %784 = vst.msk [vmem:[#allocation3] sm:$0x1f] %vm783, %v781
    %v785 = vrot.slane %v600, 4
    %v786 = vrot.slane %v603, 3
    %v787 = vsel %vm620, %v786, %v785
    %v788 = vrot.slane %v606, 2
    %v789 = vsel %vm623, %v788, %v787
    %v790 = vrot.slane %v609, 1
    %v791 = vsel %vm626, %v790, %v789
    %v792 = vsel %vm629, %v612, %v791
    %793 = vrot.lane.b32.xlu0 %v792, 96
    %v794 = vpop.permute.xlu0 %793
    %vm796 = vcmask 848640
    %797 = vst.msk [vmem:[#allocation3] sm:$0x1f] %vm796, %v794
    %v798 = vrot.slane %v600, 5
    %v799 = vrot.slane %v603, 4
    %v800 = vsel %vm620, %v799, %v798
    %v801 = vrot.slane %v606, 3
    %v802 = vsel %vm623, %v801, %v800
    %v803 = vrot.slane %v609, 2
    %v804 = vsel %vm626, %v803, %v802
    %v805 = vrot.slane %v612, 1
    %v806 = vsel %vm629, %v805, %v804
    %807 = vrot.lane.b32.xlu0 %v806, 104
    %v808 = vpop.permute.xlu0 %807
    %vm810 = vcmask 914240
    %811 = vst.msk [vmem:[#allocation3] sm:$0x1f] %vm810, %v808
    %v812 = vrot.slane %v600, 6
    %v813 = vrot.slane %v603, 5
    %v814 = vsel %vm620, %v813, %v812
    %v815 = vrot.slane %v606, 4
    %v816 = vsel %vm623, %v815, %v814
    %v817 = vrot.slane %v609, 3
    %v818 = vsel %vm626, %v817, %v816
    %v819 = vrot.slane %v612, 2
    %v820 = vsel %vm629, %v819, %v818
    %821 = vrot.lane.b32.xlu0 %v820, 112
    %v822 = vpop.permute.xlu0 %821
    %vm824 = vcmask 979840
    %825 = vst.msk [vmem:[#allocation3] sm:$0x1f] %vm824, %v822
    %v826 = vrot.slane %v600, 7
    %v827 = vrot.slane %v603, 6
    %v828 = vsel %vm620, %v827, %v826
    %v829 = vrot.slane %v606, 5
    %v830 = vsel %vm623, %v829, %v828
    %v831 = vrot.slane %v609, 4
    %v832 = vsel %vm626, %v831, %v830
    %v833 = vrot.slane %v612, 3
    %v834 = vsel %vm629, %v833, %v832
    %835 = vrot.lane.b32.xlu0 %v834, 120
    %v836 = vpop.permute.xlu0 %835
    %vm838 = vcmask 1045440
    %839 = vst.msk [vmem:[#allocation3] sm:$0x1f] %vm838, %v836
    %v845 = vrot.slane %v604, 7
    %v846 = vsel %vm620, %v845, %v601
    %v847 = vrot.slane %v607, 6
    %v848 = vsel %vm623, %v847, %v846
    %v849 = vrot.slane %v610, 5
    %v850 = vsel %vm626, %v849, %v848
    %v851 = vrot.slane %v613, 4
    %v852 = vsel %vm629, %v851, %v850
    %854 = vst.msk [vmem:[#allocation3 + $0x8] sm:$0x1f] %vm632, %v852
    %v855 = vrot.slane %v601, 1
    %v856 = vsel %vm620, %v604, %v855
    %v857 = vrot.slane %v607, 7
    %v858 = vsel %vm623, %v857, %v856
    %v859 = vrot.slane %v610, 6
    %v860 = vsel %vm626, %v859, %v858
    %v861 = vrot.slane %v613, 5
    %v862 = vsel %vm629, %v861, %v860
    %863 = vrot.lane.b32.xlu0 %v862, 8
    %v864 = vpop.permute.xlu0 %863
    %866 = vst.msk [vmem:[#allocation3 + $0x8] sm:$0x1f] %vm645, %v864
    %v867 = vrot.slane %v601, 2
    %v868 = vrot.slane %v604, 1
    %v869 = vsel %vm620, %v868, %v867
    %v870 = vsel %vm623, %v607, %v869
    %v871 = vrot.slane %v610, 7
    %v872 = vsel %vm626, %v871, %v870
    %v873 = vrot.slane %v613, 6
    %v874 = vsel %vm629, %v873, %v872
    %875 = vrot.lane.b32.xlu0 %v874, 16
    %v876 = vpop.permute.xlu0 %875
    %878 = vst.msk [vmem:[#allocation3 + $0x8] sm:$0x1f] %vm658, %v876
    %v879 = vrot.slane %v601, 3
    %v880 = vrot.slane %v604, 2
    %v881 = vsel %vm620, %v880, %v879
    %v882 = vrot.slane %v607, 1
    %v883 = vsel %vm623, %v882, %v881
    %v884 = vsel %vm626, %v610, %v883
    %v885 = vrot.slane %v613, 7
    %v886 = vsel %vm629, %v885, %v884
    %887 = vrot.lane.b32.xlu0 %v886, 24
    %v888 = vpop.permute.xlu0 %887
    %890 = vst.msk [vmem:[#allocation3 + $0x8] sm:$0x1f] %vm671, %v888
    %v891 = vrot.slane %v601, 4
    %v892 = vrot.slane %v604, 3
    %v893 = vsel %vm620, %v892, %v891
    %v894 = vrot.slane %v607, 2
    %v895 = vsel %vm623, %v894, %v893
    %v896 = vrot.slane %v610, 1
    %v897 = vsel %vm626, %v896, %v895
    %v898 = vsel %vm629, %v613, %v897
    %899 = vrot.lane.b32.xlu0 %v898, 32
    %v900 = vpop.permute.xlu0 %899
    %902 = vst.msk [vmem:[#allocation3 + $0x8] sm:$0x1f] %vm684, %v900
    %v903 = vrot.slane %v601, 5
    %v904 = vrot.slane %v604, 4
    %v905 = vsel %vm620, %v904, %v903
    %v906 = vrot.slane %v607, 3
    %v907 = vsel %vm623, %v906, %v905
    %v908 = vrot.slane %v610, 2
    %v909 = vsel %vm626, %v908, %v907
    %v910 = vrot.slane %v613, 1
    %v911 = vsel %vm629, %v910, %v909
    %912 = vrot.lane.b32.xlu0 %v911, 40
    %v913 = vpop.permute.xlu0 %912
    %915 = vst.msk [vmem:[#allocation3 + $0x8] sm:$0x1f] %vm698, %v913
    %v916 = vrot.slane %v601, 6
    %v917 = vrot.slane %v604, 5
    %v918 = vsel %vm620, %v917, %v916
    %v919 = vrot.slane %v607, 4
    %v920 = vsel %vm623, %v919, %v918
    %v921 = vrot.slane %v610, 3
    %v922 = vsel %vm626, %v921, %v920
    %v923 = vrot.slane %v613, 2
    %v924 = vsel %vm629, %v923, %v922
    %925 = vrot.lane.b32.xlu0 %v924, 48
    %v926 = vpop.permute.xlu0 %925
    %928 = vst.msk [vmem:[#allocation3 + $0x8] sm:$0x1f] %vm712, %v926
    %v929 = vrot.slane %v601, 7
    %v930 = vrot.slane %v604, 6
    %v931 = vsel %vm620, %v930, %v929
    %v932 = vrot.slane %v607, 5
    %v933 = vsel %vm623, %v932, %v931
    %v934 = vrot.slane %v610, 4
    %v935 = vsel %vm626, %v934, %v933
    %v936 = vrot.slane %v613, 3
    %v937 = vsel %vm629, %v936, %v935
    %938 = vrot.lane.b32.xlu0 %v937, 56
    %v939 = vpop.permute.xlu0 %938
    %941 = vst.msk [vmem:[#allocation3 + $0x8] sm:$0x1f] %vm726, %v939
    %v942 = vld [vmem:[#allocation3] sm:$0x1f]
    %v943 = vld [vmem:[#allocation3 + $0x8] sm:$0x1f]
    %v944 = vld [vmem:[%s5] sm:$0xff]
    %v945 = vld [vmem:[%s5 + $0x8] sm:$0xff]
    %v946 = vld [vmem:[%s5 + $0x10] sm:$0xff]
    %v947 = vld [vmem:[%s5 + $0x18] sm:$0xff]
    %v948 = vld [vmem:[%s5 + $0x20] sm:$0xff]
    %v949 = vld [vmem:[%s5 + $0x28] sm:$0xff]
    %v950 = vld [vmem:[%s5 + $0x30] sm:$0xff]
    %v951 = vld [vmem:[%s5 + $0x38] sm:$0xff]
    %v952 = vld [vmem:[%s5 + $0x40] sm:$0xff]
    %v953 = vld [vmem:[%s5 + $0x48] sm:$0xff]
    %v954 = vld [vmem:[%s5 + $0x50] sm:$0xff]
    %v955 = vld [vmem:[%s5 + $0x58] sm:$0xff]
    %v956 = vld [vmem:[%s5 + $0x60] sm:$0xff]
    %v957 = vld [vmem:[%s5 + $0x68] sm:$0xff]
    %v958 = vld [vmem:[%s5 + $0x70] sm:$0xff]
    %v959 = vld [vmem:[%s5 + $0x78] sm:$0xff]
    %v960 = vld [vmem:[%s5 + $0x80] sm:$0xff]
    %v961 = vld [vmem:[%s5 + $0x88] sm:$0xff]
    %v962 = vld [vmem:[%s5 + $0x90] sm:$0xff]
    %v963 = vld [vmem:[%s5 + $0x98] sm:$0xff]
    %v964 = vld [vmem:[%s5 + $0xa0] sm:$0xff]
    %v965 = vld [vmem:[%s5 + $0xa8] sm:$0xff]
    %v966 = vld [vmem:[%s5 + $0xb0] sm:$0xff]
    %v967 = vld [vmem:[%s5 + $0xb8] sm:$0xff]
    %v968 = vld [vmem:[%s6] sm:$0x1]
    %v970 = vperm.slane %v968, 0
    %vm972 = vcmask 523264
    %v974 = vsel %vm972, %v943, 0
    %976 = vmatpush.msra.mxu0 %v959
    %977 = vmatpush.msra.mxu0 %v958
    %978 = vmatpush.msra.mxu0 %v957
    %979 = vmatpush.msra.mxu0 %v956
    %980 = vmatpush.msra.mxu0 %v955
    %981 = vmatpush.msra.mxu0 %v954
    %982 = vmatpush.msra.mxu0 %v953
    %983 = vmatpush.msra.mxu0 %v952
    %984 = vmatpush.msra.mxu0 %v951
    %985 = vmatpush.msra.mxu0 %v950
    %986 = vmatpush.msra.mxu0 %v949
    %987 = vmatpush.msra.mxu0 %v948
    %988 = vmatpush.msra.mxu0 %v947
    %989 = vmatpush.msra.mxu0 %v946
    %990 = vmatpush.msra.mxu0 %v945
    %991 = vmatpush.msra.mxu0 %v944
    %992 = vmatmul.f32.gmra.mxu0 %v942
    %v993 = vpop.f32.mrf.mxu0
    %v994 = vadd.f32 %v970, %v993
    %995 = vdwg.mxu0
    %996 = vmatpush.msra.mxu0 0.0
    %997 = vmatpush.msra.mxu0 0.0
    %998 = vmatpush.msra.mxu0 0.0
    %999 = vmatpush.msra.mxu0 0.0
    %1000 = vmatpush.msra.mxu0 0.0
    %1001 = vmatpush.msra.mxu0 0.0
    %1002 = vmatpush.msra.mxu0 0.0
    %1003 = vmatpush.msra.mxu0 0.0
    %1004 = vmatpush.msra.mxu0 %v967
    %1005 = vmatpush.msra.mxu0 %v966
    %1006 = vmatpush.msra.mxu0 %v965
    %1007 = vmatpush.msra.mxu0 %v964
    %1008 = vmatpush.msra.mxu0 %v963
    %1009 = vmatpush.msra.mxu0 %v962
    %1010 = vmatpush.msra.mxu0 %v961
    %1011 = vmatpush.msra.mxu0 %v960
    %1012 = vmatmul.f32.gmra.mxu0 %v974
    %v1013 = vpop.f32.mrf.mxu0
    %v1014 = vadd.f32 %v994, %v1013
    %1015 = vdwg.mxu0
    %vm1016 = vcmask 585728
    %v1017 = vsel %vm1016, %v1014, 0.0
    %v1018 = vrot.slane %v1017, 4
    %v1019 = vadd.f32 %v1017, %v1018
    %v1020 = vrot.slane %v1019, 2
    %v1021 = vadd.f32 %v1019, %v1020
    %v1022 = vrot.slane %v1021, 1
    %v1023 = vadd.f32 %v1021, %v1022
    %v1024 = vld [vmem:[%s7] sm:$0xff]
    %v1025 = vld [vmem:[%s7 + $0x8] sm:$0xff]
    %v1026 = vld [vmem:[%s7 + $0x10] sm:$0xff]
    %v1027 = vld [vmem:[%s7 + $0x18] sm:$0xff]
    %v1028 = vld [vmem:[%s7 + $0x20] sm:$0xff]
    %v1029 = vld [vmem:[%s7 + $0x28] sm:$0xff]
    %v1030 = vld [vmem:[%s7 + $0x30] sm:$0xff]
    %v1031 = vld [vmem:[%s7 + $0x38] sm:$0xff]
    %v1032 = vld [vmem:[%s7 + $0x40] sm:$0xff]
    %vm1033 = vcmask 588800
    %v1035 = vsel %vm1033, %v1023, 0
    %1037 = vmatpush.msra.mxu0 0.0
    %1038 = vmatpush.msra.mxu0 0.0
    %1039 = vmatpush.msra.mxu0 0.0
    %1040 = vmatpush.msra.mxu0 0.0
    %1041 = vmatpush.msra.mxu0 0.0
    %1042 = vmatpush.msra.mxu0 0.0
    %1043 = vmatpush.msra.mxu0 0.0
    %1044 = vmatpush.msra.mxu0 %v1032
    %1045 = vmatpush.msra.mxu0 %v1031
    %1046 = vmatpush.msra.mxu0 %v1030
    %1047 = vmatpush.msra.mxu0 %v1029
    %1048 = vmatpush.msra.mxu0 %v1028
    %1049 = vmatpush.msra.mxu0 %v1027
    %1050 = vmatpush.msra.mxu0 %v1026
    %1051 = vmatpush.msra.mxu0 %v1025
    %1052 = vmatpush.msra.mxu0 %v1024
    %1053 = vmatmul.f32.gmra.mxu0 %v1035
    %v1054 = vpop.f32.mrf.mxu0
    %v1055 = vadd.f32 0.0, %v1054
    %1056 = vdwg.mxu0
    %v1057 = vrcp.pop 45.0
    %v1058 = vmul.f32 45.0, %v1057
    %v1059 = vsub.f32 1.0, %v1058
    %v1060 = vmul.f32 %v1057, %v1059
    %v1061 = vadd.f32 %v1057, %v1060
    %vm1062 = vweird.f32 %v1057
    %v1063 = vsel %vm1062, %v1057, %v1061
    %v1064 = vmul.f32 %v1055, %v1063
    %v1065 = vld [vmem:[%s8] sm:$0xff]
    %v1067 = vsel %vm163, %v1064, 0
    %1069 = vmatpush.msra.mxu0 0.0
    %1070 = vmatpush.msra.mxu0 0.0
    %1071 = vmatpush.msra.mxu0 0.0
    %1072 = vmatpush.msra.mxu0 0.0
    %1073 = vmatpush.msra.mxu0 0.0
    %1074 = vmatpush.msra.mxu0 0.0
    %1075 = vmatpush.msra.mxu0 0.0
    %1076 = vmatpush.msra.mxu0 0.0
    %1077 = vmatpush.msra.mxu0 0.0
    %1078 = vmatpush.msra.mxu0 0.0
    %1079 = vmatpush.msra.mxu0 0.0
    %1080 = vmatpush.msra.mxu0 0.0
    %1081 = vmatpush.msra.mxu0 0.0
    %1082 = vmatpush.msra.mxu0 0.0
    %1083 = vmatpush.msra.mxu0 0.0
    %1084 = vmatpush.msra.mxu0 %v1065
    %1085 = vmatmul.f32.gmra.mxu0 %v1067
    %v1086 = vpop.f32.mrf.mxu0
    %v1087 = vadd.f32 0.0, %v1086
    %1088 = vdwg.mxu0
    %v1089 = vperm.slane %v1087, 0
    %v1090 = vsub.f32 %v1014, %v1089
    %v1091 = vmul.f32 %v1090, %v1090
    %v1092 = vsel %vm1016, %v1091, 0.0
    %v1093 = vrot.slane %v1092, 4
    %v1094 = vadd.f32 %v1092, %v1093
    %v1095 = vrot.slane %v1094, 2
    %v1096 = vadd.f32 %v1094, %v1095
    %v1097 = vrot.slane %v1096, 1
    %v1098 = vadd.f32 %v1096, %v1097
    %v1100 = vsel %vm1033, %v1098, 0
    %1102 = vmatpush.msra.mxu0 0.0
    %1103 = vmatpush.msra.mxu0 0.0
    %1104 = vmatpush.msra.mxu0 0.0
    %1105 = vmatpush.msra.mxu0 0.0
    %1106 = vmatpush.msra.mxu0 0.0
    %1107 = vmatpush.msra.mxu0 0.0
    %1108 = vmatpush.msra.mxu0 0.0
    %1109 = vmatpush.msra.mxu0 %v1032
    %1110 = vmatpush.msra.mxu0 %v1031
    %1111 = vmatpush.msra.mxu0 %v1030
    %1112 = vmatpush.msra.mxu0 %v1029
    %1113 = vmatpush.msra.mxu0 %v1028
    %1114 = vmatpush.msra.mxu0 %v1027
    %1115 = vmatpush.msra.mxu0 %v1026
    %1116 = vmatpush.msra.mxu0 %v1025
    %1117 = vmatpush.msra.mxu0 %v1024
    %1118 = vmatmul.f32.gmra.mxu0 %v1100
    %v1119 = vpop.f32.mrf.mxu0
    %v1120 = vadd.f32 0.0, %v1119
    %1121 = vdwg.mxu0
    %v1122 = vmul.f32 %v1120, %v1063
    %v1123 = vadd.f32 %v1122, 1e-05
    %v1124 = vrsqrt.pop %v1123
    %v1125 = vmul.f32 %v1124, %v1123
    %v1126 = vmul.f32 %v1125, %v1124
    %v1127 = vmul.f32 0.5, %v1126
    %v1128 = vsub.f32 1.5, %v1127
    %v1129 = vmul.f32 %v1124, %v1128
    %vm1130 = vweird.f32 %v1123
    %vm1131 = vweird.f32 %v1124
    %vm1132 = vmor %vm1130, %vm1131
    %v1133 = vsel %vm1132, %v1124, %v1129
    %v1135 = vsel %vm163, %v1133, 0
    %1137 = vmatpush.msra.mxu0 0.0
    %1138 = vmatpush.msra.mxu0 0.0
    %1139 = vmatpush.msra.mxu0 0.0
    %1140 = vmatpush.msra.mxu0 0.0
    %1141 = vmatpush.msra.mxu0 0.0
    %1142 = vmatpush.msra.mxu0 0.0
    %1143 = vmatpush.msra.mxu0 0.0
    %1144 = vmatpush.msra.mxu0 0.0
    %1145 = vmatpush.msra.mxu0 0.0
    %1146 = vmatpush.msra.mxu0 0.0
    %1147 = vmatpush.msra.mxu0 0.0
    %1148 = vmatpush.msra.mxu0 0.0
    %1149 = vmatpush.msra.mxu0 0.0
    %1150 = vmatpush.msra.mxu0 0.0
    %1151 = vmatpush.msra.mxu0 0.0
    %1152 = vmatpush.msra.mxu0 %v1065
    %1153 = vmatmul.f32.gmra.mxu0 %v1135
    %v1154 = vpop.f32.mrf.mxu0
    %v1155 = vadd.f32 0.0, %v1154
    %1156 = vdwg.mxu0
    %v1157 = vperm.slane %v1155, 0
    %v1158 = vmul.f32 %v1090, %v1157
    %vm1159 = vcmp.ge.f32.partialorder %v1158, 0.0
    %v1160 = vmul.f32 %v1158, 0.01
    %v1161 = vsel %vm1159, %v1158, %v1160
    %v1162 = vld [vmem:[%s9] sm:$0xff]
    %v1163 = vld [vmem:[%s9 + $0x8] sm:$0xff]
    %v1164 = vld [vmem:[%s9 + $0x10] sm:$0xff]
    %v1165 = vld [vmem:[%s9 + $0x18] sm:$0xff]
    %v1166 = vld [vmem:[%s9 + $0x20] sm:$0xff]
    %v1167 = vld [vmem:[%s9 + $0x28] sm:$0xff]
    %v1168 = vld [vmem:[%s9 + $0x30] sm:$0xff]
    %v1169 = vld [vmem:[%s9 + $0x38] sm:$0xff]
    %v1170 = vld [vmem:[%s9 + $0x40] sm:$0xff]
    %v1171 = vld [vmem:[%s10] sm:$0x1]
    %v1173 = vperm.slane %v1171, 0
    %v1176 = vsel %vm1033, %v1161, 0
    %1178 = vmatpush.msra.mxu0 0.0
    %1179 = vmatpush.msra.mxu0 0.0
    %1180 = vmatpush.msra.mxu0 0.0
    %1181 = vmatpush.msra.mxu0 0.0
    %1182 = vmatpush.msra.mxu0 0.0
    %1183 = vmatpush.msra.mxu0 0.0
    %1184 = vmatpush.msra.mxu0 0.0
    %1185 = vmatpush.msra.mxu0 %v1170
    %1186 = vmatpush.msra.mxu0 %v1169
    %1187 = vmatpush.msra.mxu0 %v1168
    %1188 = vmatpush.msra.mxu0 %v1167
    %1189 = vmatpush.msra.mxu0 %v1166
    %1190 = vmatpush.msra.mxu0 %v1165
    %1191 = vmatpush.msra.mxu0 %v1164
    %1192 = vmatpush.msra.mxu0 %v1163
    %1193 = vmatpush.msra.mxu0 %v1162
    %1194 = vmatmul.f32.gmra.mxu0 %v1176
    %v1195 = vpop.f32.mrf.mxu0
    %v1196 = vadd.f32 %v1173, %v1195
    %1197 = vdwg.mxu0
    %v1198 = vld [vmem:[%s11] sm:$0xff]
    %v1199 = vld [vmem:[%s11 + $0x8] sm:$0xff]
    %v1200 = vld [vmem:[%s11 + $0x10] sm:$0xff]
    %v1201 = vld [vmem:[%s11 + $0x18] sm:$0xff]
    %v1202 = vld [vmem:[%s11 + $0x20] sm:$0xff]
    %v1203 = vld [vmem:[%s11 + $0x28] sm:$0xff]
    %v1204 = vld [vmem:[%s11 + $0x30] sm:$0xff]
    %v1205 = vld [vmem:[%s11 + $0x38] sm:$0xff]
    %v1206 = vld [vmem:[%s11 + $0x40] sm:$0xff]
    %v1207 = vld [vmem:[%s11 + $0x48] sm:$0xff]
    %v1208 = vld [vmem:[%s11 + $0x50] sm:$0xff]
    %v1209 = vld [vmem:[%s11 + $0x58] sm:$0xff]
    %v1210 = vld [vmem:[%s11 + $0x60] sm:$0xff]
    %v1211 = vld [vmem:[%s11 + $0x68] sm:$0xff]
    %v1212 = vld [vmem:[%s11 + $0x70] sm:$0xff]
    %v1213 = vld [vmem:[%s11 + $0x78] sm:$0xff]
    %v1214 = vld [vmem:[%s12] sm:$0xff]
    %v1216 = vperm.slane %v1214, 0
    %v1217 = vperm.slane %v1214, 1
    %v1218 = vperm.slane %v1214, 2
    %v1219 = vperm.slane %v1214, 3
    %v1220 = vperm.slane %v1214, 4
    %v1221 = vperm.slane %v1214, 5
    %v1222 = vperm.slane %v1214, 6
    %v1223 = vperm.slane %v1214, 7
    %v1233 = vsel %vm70, %v1196, 0
    %1235 = vmatpush.msra.mxu0 0.0
    %1236 = vmatpush.msra.mxu0 0.0
    %1237 = vmatpush.msra.mxu0 0.0
    %1238 = vmatpush.msra.mxu0 0.0
    %1239 = vmatpush.msra.mxu0 0.0
    %1240 = vmatpush.msra.mxu0 0.0
    %1241 = vmatpush.msra.mxu0 0.0
    %1242 = vmatpush.msra.mxu0 0.0
    %1243 = vmatpush.msra.mxu0 0.0
    %1244 = vmatpush.msra.mxu0 0.0
    %1245 = vmatpush.msra.mxu0 0.0
    %1246 = vmatpush.msra.mxu0 0.0
    %1247 = vmatpush.msra.mxu0 0.0
    %1248 = vmatpush.msra.mxu0 0.0
    %1249 = vmatpush.msra.mxu0 %v1206
    %1250 = vmatpush.msra.mxu0 %v1198
    %1251 = vmatmul.f32.gmra.mxu0 %v1233
    %v1252 = vpop.f32.mrf.mxu0
    %v1253 = vadd.f32 %v1216, %v1252
    %1254 = vdwg.mxu0
    %1255 = vmatpush.msra.mxu0 0.0
    %1256 = vmatpush.msra.mxu0 0.0
    %1257 = vmatpush.msra.mxu0 0.0
    %1258 = vmatpush.msra.mxu0 0.0
    %1259 = vmatpush.msra.mxu0 0.0
    %1260 = vmatpush.msra.mxu0 0.0
    %1261 = vmatpush.msra.mxu0 0.0
    %1262 = vmatpush.msra.mxu0 0.0
    %1263 = vmatpush.msra.mxu0 0.0
    %1264 = vmatpush.msra.mxu0 0.0
    %1265 = vmatpush.msra.mxu0 0.0
    %1266 = vmatpush.msra.mxu0 0.0
    %1267 = vmatpush.msra.mxu0 0.0
    %1268 = vmatpush.msra.mxu0 0.0
    %1269 = vmatpush.msra.mxu0 %v1207
    %1270 = vmatpush.msra.mxu0 %v1199
    %1271 = vmatmul.f32.gmra.mxu0 %v1233
    %v1272 = vpop.f32.mrf.mxu0
    %v1273 = vadd.f32 %v1217, %v1272
    %1274 = vdwg.mxu0
    %1275 = vmatpush.msra.mxu0 0.0
    %1276 = vmatpush.msra.mxu0 0.0
    %1277 = vmatpush.msra.mxu0 0.0
    %1278 = vmatpush.msra.mxu0 0.0
    %1279 = vmatpush.msra.mxu0 0.0
    %1280 = vmatpush.msra.mxu0 0.0
    %1281 = vmatpush.msra.mxu0 0.0
    %1282 = vmatpush.msra.mxu0 0.0
    %1283 = vmatpush.msra.mxu0 0.0
    %1284 = vmatpush.msra.mxu0 0.0
    %1285 = vmatpush.msra.mxu0 0.0
    %1286 = vmatpush.msra.mxu0 0.0
    %1287 = vmatpush.msra.mxu0 0.0
    %1288 = vmatpush.msra.mxu0 0.0
    %1289 = vmatpush.msra.mxu0 %v1208
    %1290 = vmatpush.msra.mxu0 %v1200
    %1291 = vmatmul.f32.gmra.mxu0 %v1233
    %v1292 = vpop.f32.mrf.mxu0
    %v1293 = vadd.f32 %v1218, %v1292
    %1294 = vdwg.mxu0
    %1295 = vmatpush.msra.mxu0 0.0
    %1296 = vmatpush.msra.mxu0 0.0
    %1297 = vmatpush.msra.mxu0 0.0
    %1298 = vmatpush.msra.mxu0 0.0
    %1299 = vmatpush.msra.mxu0 0.0
    %1300 = vmatpush.msra.mxu0 0.0
    %1301 = vmatpush.msra.mxu0 0.0
    %1302 = vmatpush.msra.mxu0 0.0
    %1303 = vmatpush.msra.mxu0 0.0
    %1304 = vmatpush.msra.mxu0 0.0
    %1305 = vmatpush.msra.mxu0 0.0
    %1306 = vmatpush.msra.mxu0 0.0
    %1307 = vmatpush.msra.mxu0 0.0
    %1308 = vmatpush.msra.mxu0 0.0
    %1309 = vmatpush.msra.mxu0 %v1209
    %1310 = vmatpush.msra.mxu0 %v1201
    %1311 = vmatmul.f32.gmra.mxu0 %v1233
    %v1312 = vpop.f32.mrf.mxu0
    %v1313 = vadd.f32 %v1219, %v1312
    %1314 = vdwg.mxu0
    %1315 = vmatpush.msra.mxu0 0.0
    %1316 = vmatpush.msra.mxu0 0.0
    %1317 = vmatpush.msra.mxu0 0.0
    %1318 = vmatpush.msra.mxu0 0.0
    %1319 = vmatpush.msra.mxu0 0.0
    %1320 = vmatpush.msra.mxu0 0.0
    %1321 = vmatpush.msra.mxu0 0.0
    %1322 = vmatpush.msra.mxu0 0.0
    %1323 = vmatpush.msra.mxu0 0.0
    %1324 = vmatpush.msra.mxu0 0.0
    %1325 = vmatpush.msra.mxu0 0.0
    %1326 = vmatpush.msra.mxu0 0.0
    %1327 = vmatpush.msra.mxu0 0.0
    %1328 = vmatpush.msra.mxu0 0.0
    %1329 = vmatpush.msra.mxu0 %v1210
    %1330 = vmatpush.msra.mxu0 %v1202
    %1331 = vmatmul.f32.gmra.mxu0 %v1233
    %v1332 = vpop.f32.mrf.mxu0
    %v1333 = vadd.f32 %v1220, %v1332
    %1334 = vdwg.mxu0
    %1335 = vmatpush.msra.mxu0 0.0
    %1336 = vmatpush.msra.mxu0 0.0
    %1337 = vmatpush.msra.mxu0 0.0
    %1338 = vmatpush.msra.mxu0 0.0
    %1339 = vmatpush.msra.mxu0 0.0
    %1340 = vmatpush.msra.mxu0 0.0
    %1341 = vmatpush.msra.mxu0 0.0
    %1342 = vmatpush.msra.mxu0 0.0
    %1343 = vmatpush.msra.mxu0 0.0
    %1344 = vmatpush.msra.mxu0 0.0
    %1345 = vmatpush.msra.mxu0 0.0
    %1346 = vmatpush.msra.mxu0 0.0
    %1347 = vmatpush.msra.mxu0 0.0
    %1348 = vmatpush.msra.mxu0 0.0
    %1349 = vmatpush.msra.mxu0 %v1211
    %1350 = vmatpush.msra.mxu0 %v1203
    %1351 = vmatmul.f32.gmra.mxu0 %v1233
    %v1352 = vpop.f32.mrf.mxu0
    %v1353 = vadd.f32 %v1221, %v1352
    %1354 = vdwg.mxu0
    %1355 = vmatpush.msra.mxu0 0.0
    %1356 = vmatpush.msra.mxu0 0.0
    %1357 = vmatpush.msra.mxu0 0.0
    %1358 = vmatpush.msra.mxu0 0.0
    %1359 = vmatpush.msra.mxu0 0.0
    %1360 = vmatpush.msra.mxu0 0.0
    %1361 = vmatpush.msra.mxu0 0.0
    %1362 = vmatpush.msra.mxu0 0.0
    %1363 = vmatpush.msra.mxu0 0.0
    %1364 = vmatpush.msra.mxu0 0.0
    %1365 = vmatpush.msra.mxu0 0.0
    %1366 = vmatpush.msra.mxu0 0.0
    %1367 = vmatpush.msra.mxu0 0.0
    %1368 = vmatpush.msra.mxu0 0.0
    %1369 = vmatpush.msra.mxu0 %v1212
    %1370 = vmatpush.msra.mxu0 %v1204
    %1371 = vmatmul.f32.gmra.mxu0 %v1233
    %v1372 = vpop.f32.mrf.mxu0
    %v1373 = vadd.f32 %v1222, %v1372
    %1374 = vdwg.mxu0
    %1375 = vmatpush.msra.mxu0 0.0
    %1376 = vmatpush.msra.mxu0 0.0
    %1377 = vmatpush.msra.mxu0 0.0
    %1378 = vmatpush.msra.mxu0 0.0
    %1379 = vmatpush.msra.mxu0 0.0
    %1380 = vmatpush.msra.mxu0 0.0
    %1381 = vmatpush.msra.mxu0 0.0
    %1382 = vmatpush.msra.mxu0 0.0
    %1383 = vmatpush.msra.mxu0 0.0
    %1384 = vmatpush.msra.mxu0 0.0
    %1385 = vmatpush.msra.mxu0 0.0
    %1386 = vmatpush.msra.mxu0 0.0
    %1387 = vmatpush.msra.mxu0 0.0
    %1388 = vmatpush.msra.mxu0 0.0
    %1389 = vmatpush.msra.mxu0 %v1213
    %1390 = vmatpush.msra.mxu0 %v1205
    %1391 = vmatmul.f32.gmra.mxu0 %v1233
    %v1392 = vpop.f32.mrf.mxu0
    %v1393 = vadd.f32 %v1223, %v1392
    %1394 = vdwg.mxu0
    %v1395 = vld [vmem:[%s13] sm:$0xff]
    %v1396 = vld [vmem:[%s13 + $0x8] sm:$0xff]
    %v1397 = vld [vmem:[%s13 + $0x10] sm:$0xff]
    %v1398 = vld [vmem:[%s13 + $0x18] sm:$0xff]
    %v1399 = vld [vmem:[%s13 + $0x20] sm:$0xff]
    %v1400 = vld [vmem:[%s13 + $0x28] sm:$0xff]
    %v1401 = vld [vmem:[%s13 + $0x30] sm:$0xff]
    %v1402 = vld [vmem:[%s13 + $0x38] sm:$0xff]
    %v1403 = vld [vmem:[%s13 + $0x40] sm:$0xff]
    %v1404 = vld [vmem:[%s13 + $0x48] sm:$0xff]
    %v1405 = vld [vmem:[%s13 + $0x50] sm:$0xff]
    %v1406 = vld [vmem:[%s13 + $0x58] sm:$0xff]
    %v1407 = vld [vmem:[%s13 + $0x60] sm:$0xff]
    %v1408 = vld [vmem:[%s13 + $0x68] sm:$0xff]
    %v1409 = vld [vmem:[%s13 + $0x70] sm:$0xff]
    %v1410 = vld [vmem:[%s13 + $0x78] sm:$0xff]
    %v1411 = vld [vmem:[%s13 + $0x80] sm:$0xff]
    %v1412 = vld [vmem:[%s13 + $0x88] sm:$0xff]
    %v1413 = vld [vmem:[%s13 + $0x90] sm:$0xff]
    %v1414 = vld [vmem:[%s13 + $0x98] sm:$0xff]
    %v1415 = vld [vmem:[%s13 + $0xa0] sm:$0xff]
    %v1416 = vld [vmem:[%s13 + $0xa8] sm:$0xff]
    %v1417 = vld [vmem:[%s13 + $0xb0] sm:$0xff]
    %v1418 = vld [vmem:[%s13 + $0xb8] sm:$0xff]
    %v1419 = vld [vmem:[%s13 + $0xc0] sm:$0xff]
    %v1420 = vld [vmem:[%s13 + $0xc8] sm:$0xff]
    %v1421 = vld [vmem:[%s13 + $0xd0] sm:$0xff]
    %v1422 = vld [vmem:[%s13 + $0xd8] sm:$0xff]
    %v1423 = vld [vmem:[%s13 + $0xe0] sm:$0xff]
    %v1424 = vld [vmem:[%s13 + $0xe8] sm:$0xff]
    %v1425 = vld [vmem:[%s13 + $0xf0] sm:$0xff]
    %v1426 = vld [vmem:[%s13 + $0xf8] sm:$0xff]
    %v1427 = vld [vmem:[%s13 + $0x100] sm:$0xff]
    %v1428 = vld [vmem:[%s13 + $0x108] sm:$0xff]
    %v1429 = vld [vmem:[%s13 + $0x110] sm:$0xff]
    %v1430 = vld [vmem:[%s13 + $0x118] sm:$0xff]
    %v1431 = vld [vmem:[%s13 + $0x120] sm:$0xff]
    %v1432 = vld [vmem:[%s13 + $0x128] sm:$0xff]
    %v1433 = vld [vmem:[%s13 + $0x130] sm:$0xff]
    %v1434 = vld [vmem:[%s13 + $0x138] sm:$0xff]
    %v1435 = vld [vmem:[%s13 + $0x140] sm:$0xff]
    %v1436 = vld [vmem:[%s13 + $0x148] sm:$0xff]
    %v1437 = vld [vmem:[%s13 + $0x150] sm:$0xff]
    %v1438 = vld [vmem:[%s13 + $0x158] sm:$0xff]
    %v1439 = vld [vmem:[%s13 + $0x160] sm:$0xff]
    %v1440 = vld [vmem:[%s13 + $0x168] sm:$0xff]
    %v1441 = vld [vmem:[%s13 + $0x170] sm:$0xff]
    %v1442 = vld [vmem:[%s13 + $0x178] sm:$0xff]
    %v1443 = vld [vmem:[%s13 + $0x180] sm:$0xff]
    %v1444 = vld [vmem:[%s13 + $0x188] sm:$0xff]
    %v1445 = vld [vmem:[%s13 + $0x190] sm:$0xff]
    %v1446 = vld [vmem:[%s13 + $0x198] sm:$0xff]
    %v1447 = vld [vmem:[%s13 + $0x1a0] sm:$0xff]
    %v1448 = vld [vmem:[%s13 + $0x1a8] sm:$0xff]
    %v1449 = vld [vmem:[%s13 + $0x1b0] sm:$0xff]
    %v1450 = vld [vmem:[%s13 + $0x1b8] sm:$0xff]
    %v1451 = vld [vmem:[%s13 + $0x1c0] sm:$0xff]
    %v1452 = vld [vmem:[%s13 + $0x1c8] sm:$0xff]
    %v1453 = vld [vmem:[%s13 + $0x1d0] sm:$0xff]
    %v1454 = vld [vmem:[%s13 + $0x1d8] sm:$0xff]
    %v1455 = vld [vmem:[%s13 + $0x1e0] sm:$0xff]
    %v1456 = vld [vmem:[%s13 + $0x1e8] sm:$0xff]
    %v1457 = vld [vmem:[%s13 + $0x1f0] sm:$0xff]
    %v1458 = vld [vmem:[%s13 + $0x1f8] sm:$0xff]
    %v1459 = vld [vmem:[%s13 + $0x200] sm:$0xff]
    %v1460 = vld [vmem:[%s13 + $0x208] sm:$0xff]
    %v1461 = vld [vmem:[%s13 + $0x210] sm:$0xff]
    %v1462 = vld [vmem:[%s13 + $0x218] sm:$0xff]
    %v1463 = vld [vmem:[%s13 + $0x220] sm:$0xff]
    %v1464 = vld [vmem:[%s13 + $0x228] sm:$0xff]
    %v1465 = vld [vmem:[%s13 + $0x230] sm:$0xff]
    %v1466 = vld [vmem:[%s13 + $0x238] sm:$0xff]
    %v1467 = vld [vmem:[%s13 + $0x240] sm:$0xff]
    %v1468 = vld [vmem:[%s13 + $0x248] sm:$0xff]
    %v1469 = vld [vmem:[%s13 + $0x250] sm:$0xff]
    %v1470 = vld [vmem:[%s13 + $0x258] sm:$0xff]
    %v1471 = vld [vmem:[%s13 + $0x260] sm:$0xff]
    %v1472 = vld [vmem:[%s13 + $0x268] sm:$0xff]
    %v1473 = vld [vmem:[%s13 + $0x270] sm:$0xff]
    %v1474 = vld [vmem:[%s13 + $0x278] sm:$0xff]
    %v1475 = vld [vmem:[%s13 + $0x280] sm:$0xff]
    %v1476 = vld [vmem:[%s13 + $0x288] sm:$0xff]
    %v1477 = vld [vmem:[%s13 + $0x290] sm:$0xff]
    %v1478 = vld [vmem:[%s13 + $0x298] sm:$0xff]
    %v1479 = vld [vmem:[%s13 + $0x2a0] sm:$0xff]
    %v1480 = vld [vmem:[%s13 + $0x2a8] sm:$0xff]
    %v1481 = vld [vmem:[%s13 + $0x2b0] sm:$0xff]
    %v1482 = vld [vmem:[%s13 + $0x2b8] sm:$0xff]
    %v1483 = vld [vmem:[%s13 + $0x2c0] sm:$0xff]
    %v1484 = vld [vmem:[%s13 + $0x2c8] sm:$0xff]
    %v1485 = vld [vmem:[%s13 + $0x2d0] sm:$0xff]
    %v1486 = vld [vmem:[%s13 + $0x2d8] sm:$0xff]
    %v1487 = vld [vmem:[%s13 + $0x2e0] sm:$0xff]
    %v1488 = vld [vmem:[%s13 + $0x2e8] sm:$0xff]
    %v1489 = vld [vmem:[%s13 + $0x2f0] sm:$0xff]
    %v1490 = vld [vmem:[%s13 + $0x2f8] sm:$0xff]
    %v1491 = vld [vmem:[%s13 + $0x300] sm:$0xff]
    %v1492 = vld [vmem:[%s13 + $0x308] sm:$0xff]
    %v1493 = vld [vmem:[%s13 + $0x310] sm:$0xff]
    %v1494 = vld [vmem:[%s13 + $0x318] sm:$0xff]
    %v1495 = vld [vmem:[%s13 + $0x320] sm:$0xff]
    %v1496 = vld [vmem:[%s13 + $0x328] sm:$0xff]
    %v1497 = vld [vmem:[%s13 + $0x330] sm:$0xff]
    %v1498 = vld [vmem:[%s13 + $0x338] sm:$0xff]
    %v1499 = vld [vmem:[%s13 + $0x340] sm:$0xff]
    %v1500 = vld [vmem:[%s13 + $0x348] sm:$0xff]
    %v1501 = vld [vmem:[%s13 + $0x350] sm:$0xff]
    %v1502 = vld [vmem:[%s13 + $0x358] sm:$0xff]
    %v1503 = vld [vmem:[%s13 + $0x360] sm:$0xff]
    %v1504 = vld [vmem:[%s13 + $0x368] sm:$0xff]
    %v1505 = vld [vmem:[%s13 + $0x370] sm:$0xff]
    %v1506 = vld [vmem:[%s13 + $0x378] sm:$0xff]
    %v1507 = vld [vmem:[%s13 + $0x380] sm:$0xff]
    %v1508 = vld [vmem:[%s13 + $0x388] sm:$0xff]
    %v1509 = vld [vmem:[%s13 + $0x390] sm:$0xff]
    %v1510 = vld [vmem:[%s13 + $0x398] sm:$0xff]
    %v1511 = vld [vmem:[%s13 + $0x3a0] sm:$0xff]
    %v1512 = vld [vmem:[%s13 + $0x3a8] sm:$0xff]
    %v1513 = vld [vmem:[%s13 + $0x3b0] sm:$0xff]
    %v1514 = vld [vmem:[%s13 + $0x3b8] sm:$0xff]
    %v1515 = vld [vmem:[%s13 + $0x3c0] sm:$0xff]
    %v1516 = vld [vmem:[%s13 + $0x3c8] sm:$0xff]
    %v1517 = vld [vmem:[%s13 + $0x3d0] sm:$0xff]
    %v1518 = vld [vmem:[%s13 + $0x3d8] sm:$0xff]
    %v1519 = vld [vmem:[%s13 + $0x3e0] sm:$0xff]
    %v1520 = vld [vmem:[%s13 + $0x3e8] sm:$0xff]
    %v1521 = vld [vmem:[%s13 + $0x3f0] sm:$0xff]
    %v1522 = vld [vmem:[%s13 + $0x3f8] sm:$0xff]
    %v1523 = vld [vmem:[%s14] sm:$0x1]
    %v1525 = vperm.slane %v1523, 0
    %1527 = vmatpush.msra.mxu0 %v1410
    %1528 = vmatpush.msra.mxu0 %v1409
    %1529 = vmatpush.msra.mxu0 %v1408
    %1530 = vmatpush.msra.mxu0 %v1407
    %1531 = vmatpush.msra.mxu0 %v1406
    %1532 = vmatpush.msra.mxu0 %v1405
    %1533 = vmatpush.msra.mxu0 %v1404
    %1534 = vmatpush.msra.mxu0 %v1403
    %1535 = vmatpush.msra.mxu0 %v1402
    %1536 = vmatpush.msra.mxu0 %v1401
    %1537 = vmatpush.msra.mxu0 %v1400
    %1538 = vmatpush.msra.mxu0 %v1399
    %1539 = vmatpush.msra.mxu0 %v1398
    %1540 = vmatpush.msra.mxu0 %v1397
    %1541 = vmatpush.msra.mxu0 %v1396
    %1542 = vmatpush.msra.mxu0 %v1395
    %1543 = vmatmul.f32.gmra.mxu0 %v1253
    %v1544 = vpop.f32.mrf.mxu0
    %v1545 = vadd.f32 %v1525, %v1544
    %1546 = vdwg.mxu0
    %1547 = vmatpush.msra.mxu0 %v1426
    %1548 = vmatpush.msra.mxu0 %v1425
    %1549 = vmatpush.msra.mxu0 %v1424
    %1550 = vmatpush.msra.mxu0 %v1423
    %1551 = vmatpush.msra.mxu0 %v1422
    %1552 = vmatpush.msra.mxu0 %v1421
    %1553 = vmatpush.msra.mxu0 %v1420
    %1554 = vmatpush.msra.mxu0 %v1419
    %1555 = vmatpush.msra.mxu0 %v1418
    %1556 = vmatpush.msra.mxu0 %v1417
    %1557 = vmatpush.msra.mxu0 %v1416
    %1558 = vmatpush.msra.mxu0 %v1415
    %1559 = vmatpush.msra.mxu0 %v1414
    %1560 = vmatpush.msra.mxu0 %v1413
    %1561 = vmatpush.msra.mxu0 %v1412
    %1562 = vmatpush.msra.mxu0 %v1411
    %1563 = vmatmul.f32.gmra.mxu0 %v1273
    %v1564 = vpop.f32.mrf.mxu0
    %v1565 = vadd.f32 %v1545, %v1564
    %1566 = vdwg.mxu0
    %1567 = vmatpush.msra.mxu0 %v1442
    %1568 = vmatpush.msra.mxu0 %v1441
    %1569 = vmatpush.msra.mxu0 %v1440
    %1570 = vmatpush.msra.mxu0 %v1439
    %1571 = vmatpush.msra.mxu0 %v1438
    %1572 = vmatpush.msra.mxu0 %v1437
    %1573 = vmatpush.msra.mxu0 %v1436
    %1574 = vmatpush.msra.mxu0 %v1435
    %1575 = vmatpush.msra.mxu0 %v1434
    %1576 = vmatpush.msra.mxu0 %v1433
    %1577 = vmatpush.msra.mxu0 %v1432
    %1578 = vmatpush.msra.mxu0 %v1431
    %1579 = vmatpush.msra.mxu0 %v1430
    %1580 = vmatpush.msra.mxu0 %v1429
    %1581 = vmatpush.msra.mxu0 %v1428
    %1582 = vmatpush.msra.mxu0 %v1427
    %1583 = vmatmul.f32.gmra.mxu0 %v1293
    %v1584 = vpop.f32.mrf.mxu0
    %v1585 = vadd.f32 %v1565, %v1584
    %1586 = vdwg.mxu0
    %1587 = vmatpush.msra.mxu0 %v1458
    %1588 = vmatpush.msra.mxu0 %v1457
    %1589 = vmatpush.msra.mxu0 %v1456
    %1590 = vmatpush.msra.mxu0 %v1455
    %1591 = vmatpush.msra.mxu0 %v1454
    %1592 = vmatpush.msra.mxu0 %v1453
    %1593 = vmatpush.msra.mxu0 %v1452
    %1594 = vmatpush.msra.mxu0 %v1451
    %1595 = vmatpush.msra.mxu0 %v1450
    %1596 = vmatpush.msra.mxu0 %v1449
    %1597 = vmatpush.msra.mxu0 %v1448
    %1598 = vmatpush.msra.mxu0 %v1447
    %1599 = vmatpush.msra.mxu0 %v1446
    %1600 = vmatpush.msra.mxu0 %v1445
    %1601 = vmatpush.msra.mxu0 %v1444
    %1602 = vmatpush.msra.mxu0 %v1443
    %1603 = vmatmul.f32.gmra.mxu0 %v1313
    %v1604 = vpop.f32.mrf.mxu0
    %v1605 = vadd.f32 %v1585, %v1604
    %1606 = vdwg.mxu0
    %1607 = vmatpush.msra.mxu0 %v1474
    %1608 = vmatpush.msra.mxu0 %v1473
    %1609 = vmatpush.msra.mxu0 %v1472
    %1610 = vmatpush.msra.mxu0 %v1471
    %1611 = vmatpush.msra.mxu0 %v1470
    %1612 = vmatpush.msra.mxu0 %v1469
    %1613 = vmatpush.msra.mxu0 %v1468
    %1614 = vmatpush.msra.mxu0 %v1467
    %1615 = vmatpush.msra.mxu0 %v1466
    %1616 = vmatpush.msra.mxu0 %v1465
    %1617 = vmatpush.msra.mxu0 %v1464
    %1618 = vmatpush.msra.mxu0 %v1463
    %1619 = vmatpush.msra.mxu0 %v1462
    %1620 = vmatpush.msra.mxu0 %v1461
    %1621 = vmatpush.msra.mxu0 %v1460
    %1622 = vmatpush.msra.mxu0 %v1459
    %1623 = vmatmul.f32.gmra.mxu0 %v1333
    %v1624 = vpop.f32.mrf.mxu0
    %v1625 = vadd.f32 %v1605, %v1624
    %1626 = vdwg.mxu0
    %1627 = vmatpush.msra.mxu0 %v1490
    %1628 = vmatpush.msra.mxu0 %v1489
    %1629 = vmatpush.msra.mxu0 %v1488
    %1630 = vmatpush.msra.mxu0 %v1487
    %1631 = vmatpush.msra.mxu0 %v1486
    %1632 = vmatpush.msra.mxu0 %v1485
    %1633 = vmatpush.msra.mxu0 %v1484
    %1634 = vmatpush.msra.mxu0 %v1483
    %1635 = vmatpush.msra.mxu0 %v1482
    %1636 = vmatpush.msra.mxu0 %v1481
    %1637 = vmatpush.msra.mxu0 %v1480
    %1638 = vmatpush.msra.mxu0 %v1479
    %1639 = vmatpush.msra.mxu0 %v1478
    %1640 = vmatpush.msra.mxu0 %v1477
    %1641 = vmatpush.msra.mxu0 %v1476
    %1642 = vmatpush.msra.mxu0 %v1475
    %1643 = vmatmul.f32.gmra.mxu0 %v1353
    %v1644 = vpop.f32.mrf.mxu0
    %v1645 = vadd.f32 %v1625, %v1644
    %1646 = vdwg.mxu0
    %1647 = vmatpush.msra.mxu0 %v1506
    %1648 = vmatpush.msra.mxu0 %v1505
    %1649 = vmatpush.msra.mxu0 %v1504
    %1650 = vmatpush.msra.mxu0 %v1503
    %1651 = vmatpush.msra.mxu0 %v1502
    %1652 = vmatpush.msra.mxu0 %v1501
    %1653 = vmatpush.msra.mxu0 %v1500
    %1654 = vmatpush.msra.mxu0 %v1499
    %1655 = vmatpush.msra.mxu0 %v1498
    %1656 = vmatpush.msra.mxu0 %v1497
    %1657 = vmatpush.msra.mxu0 %v1496
    %1658 = vmatpush.msra.mxu0 %v1495
    %1659 = vmatpush.msra.mxu0 %v1494
    %1660 = vmatpush.msra.mxu0 %v1493
    %1661 = vmatpush.msra.mxu0 %v1492
    %1662 = vmatpush.msra.mxu0 %v1491
    %1663 = vmatmul.f32.gmra.mxu0 %v1373
    %v1664 = vpop.f32.mrf.mxu0
    %v1665 = vadd.f32 %v1645, %v1664
    %1666 = vdwg.mxu0
    %1667 = vmatpush.msra.mxu0 %v1522
    %1668 = vmatpush.msra.mxu0 %v1521
    %1669 = vmatpush.msra.mxu0 %v1520
    %1670 = vmatpush.msra.mxu0 %v1519
    %1671 = vmatpush.msra.mxu0 %v1518
    %1672 = vmatpush.msra.mxu0 %v1517
    %1673 = vmatpush.msra.mxu0 %v1516
    %1674 = vmatpush.msra.mxu0 %v1515
    %1675 = vmatpush.msra.mxu0 %v1514
    %1676 = vmatpush.msra.mxu0 %v1513
    %1677 = vmatpush.msra.mxu0 %v1512
    %1678 = vmatpush.msra.mxu0 %v1511
    %1679 = vmatpush.msra.mxu0 %v1510
    %1680 = vmatpush.msra.mxu0 %v1509
    %1681 = vmatpush.msra.mxu0 %v1508
    %1682 = vmatpush.msra.mxu0 %v1507
    %1683 = vmatmul.f32.gmra.mxu0 %v1393
    %v1684 = vpop.f32.mrf.mxu0
    %v1685 = vadd.f32 %v1665, %v1684
    %1686 = vdwg.mxu0
    %vm1687 = vcmask 4096
    %1688 = vst.msk [vmem:[%s15] sm:$0x1f] %vm1687, %v1685
    %vm1689 = vcmask 61448
    %v1690 = vsel %vm1689, %v1685, -inf
    %1691 = vmax.xlane.f32.xlu0 %v1690
    %v1692 = vpop.xlane.xlu0 %1691
    %v1693 = vsub.f32 %v1685, %v1692
    %v1694 = vmul.f32 %v1693, 1.442695
    %v1695 = vpow.pop %v1694
    %1697 = vrot.lane.b32.xlu0 %v1695, 127
    %v1698 = vpop.permute.xlu0 %1697
    %vm1700 = vcmask 53248
    %v1701 = vsel %vm1700, %v1698, 0.0
    %1702 = vadd.xlane.f32.xlu0 %v1701
    %v1703 = vpop.xlane.xlu0 %1702
    %v1704 = vlog2.pop %v1703
    %v1705 = vmul.f32 %v1704, 0.6931472
    %v1706 = vadd.f32 %v1692, %v1705
    %v1707 = vlaneseq
    %v1708 = vand.u32 %v1707, 127
    %v1709 = vld [vmem:[%s1] sm:$0x1f]
    %1710 = vset.pattern.permute.xlu0 0
    %1711 = vperm.xlu0 %1710, %v1709
    %v1712 = vpop.permute.xlu0 %1711
    %vm1713 = vcmp.eq.s32.totalorder %v1708, %v1712
    %v1714 = vsel %vm1713, 1.0, 0.0
    %1716 = vrot.lane.b32.xlu0 %v1714, 1
    %v1717 = vpop.permute.xlu0 %1716
    %v1719 = vmul.f32 %v1685, %v1717
    %1721 = vrot.lane.b32.xlu0 %v1719, 127
    %v1722 = vpop.permute.xlu0 %1721
    %v1724 = vsel %vm1700, %v1722, 0.0
    %1725 = vadd.xlane.f32.xlu0 %v1724
    %v1726 = vpop.xlane.xlu0 %1725
    %v1727 = vsub.f32 %v1706, %v1726
    %v1728 = vsel %vm1687, %v1727, 0.0
    %1729 = vadd.xlane.f32.xlu0 %v1728
    %v1730 = vpop.xlane.xlu0 %1729
    %v1731 = vrot.slane %v1730, 4
    %v1732 = vadd.f32 %v1730, %v1731
    %v1733 = vrot.slane %v1732, 2
    %v1734 = vadd.f32 %v1732, %v1733
    %v1735 = vrot.slane %v1734, 1
    %v1736 = vadd.f32 %v1734, %v1735
    %s1737 = vtos %v1736
    %v1738 = vrcp.pop 5.0
    %v1739 = vmul.f32 5.0, %v1738
    %v1740 = vsub.f32 1.0, %v1739
    %v1741 = vmul.f32 %v1738, %v1740
    %v1742 = vadd.f32 %v1738, %v1741
    %vm1743 = vweird.f32 %v1738
    %v1744 = vsel %vm1743, %v1738, %v1742
    %s1745 = vtos %v1744
    %s1746 = smul.f32 %s1737, %s1745
    %v1747 = vstv %s1746
    %vm1748 = vcmask 0
    %1749 = vst.msk [vmem:[#allocation6] sm:$0x1] %vm1748, %v1747
    // Predicated region
    $region58: #{obj_crop_discriminator_forward.1} parent=1 // pred_check
      _
    $region59: #{obj_crop_discriminator_forward.1} parent=1 // pred_check_branch
      %1751 = sbr.rel (0) target = $region61
    $region60: #{obj_crop_discriminator_forward.1} parent=1 // pred_region
      _
    $region61: #{obj_crop_discriminator_forward.1} parent=1 // pred_fallthru
      _
    // Predicated region
    $region62: #{obj_crop_discriminator_forward.1} parent=1 // pred_check
      _
    $region63: #{obj_crop_discriminator_forward.1} parent=1 // pred_check_branch
      %1753 = sbr.rel (0) target = $region65
    $region64: #{obj_crop_discriminator_forward.1} parent=1 // pred_region
      %1755 = vsyncadd [#allocation7], 0
      %s1757 = sshll.u32 [#allocation6], 4
      %s1758 = int_to_ptr.vmem [resolvable:$true] %s1757
      %s1759 = sshll.u32 %s16, 4
      %s1760 = int_to_ptr.hbm [resolvable:$true] %s1759
      %1762 = dma.vmem_to_hbm [thread:$0]  %s1758, 16, %s1760, [#allocation7]
    $region65: #{obj_crop_discriminator_forward.1} parent=1 // pred_fallthru
      _
    // Predicated region
    $region66: #{obj_crop_discriminator_forward.1} parent=1 // pred_check
      _
    $region67: #{obj_crop_discriminator_forward.1} parent=1 // pred_check_branch
      %1764 = sbr.rel (0) target = $region69
    $region68: #{obj_crop_discriminator_forward.1} parent=1 // pred_region
      _
    $region69: #{obj_crop_discriminator_forward.1} parent=1 // pred_fallthru
      _
    // Predicated region
    $region70: #{obj_crop_discriminator_forward.1} parent=1 // pred_check
      _
    $region71: #{obj_crop_discriminator_forward.1} parent=1 // pred_check_branch
      %1766 = sbr.rel (0) target = $region73
    $region72: #{obj_crop_discriminator_forward.1} parent=1 // pred_region
      %1768 = dma.done [#allocation7], 16
    $region73: #{obj_crop_discriminator_forward.1} parent=1 // pred_fallthru
      _
    %1769 = vsyncpa [#allocation7], 1

</llo_original>
